<compile_context>
chip_gen: v7x
topology: tpu7x:2x2x1
jax: 0.10.0
libtpu: 0.0.40
codegen_flags: <defaults>
</compile_context>

<pallas_src>
import math
import functools

import jax
import jax.numpy as jnp
from jax.experimental import pallas as pl
from jax.experimental.pallas import tpu as pltpu


def _bert_attention_kernel(x_ref, k_ref, v_ref, wq_ref, bq_ref, wo_ref, bo_ref,
                           *rest, num_heads, head_size, eps, rescale, bf16_exp):
    if rescale:
        w2_ref, b2_ref, gamma_ref, beta_ref, o_ref, ctx_scr = rest
    else:
        gamma_ref, beta_ref, o_ref, ctx_scr = rest

    x_f32 = x_ref[0]                                      # (tq, Hin) f32
    x_bf = x_f32.astype(jnp.bfloat16)

    # --- Q projection; fold 1/sqrt(d) into Q once per tile. -----------------
    scale = 1.0 / math.sqrt(head_size)
    q = (jnp.dot(x_bf, wq_ref[...], preferred_element_type=jnp.float32)
         + bq_ref[...]) * scale
    q = q.astype(jnp.bfloat16)                            # (tq, A)

    # --- Per-head attention; context written into bf16 VMEM scratch. --------
    contract_last = (((1,), (1,)), ((), ()))   # q @ k^T without materializing k.T
    for h in range(num_heads):
        sl = slice(h * head_size, (h + 1) * head_size)
        qh = q[:, sl]                                     # (tq, d) bf16
        kh = k_ref[0, :, sl]                              # (S, d)  bf16
        vh = v_ref[0, :, sl]                              # (S, d)  bf16
        s = jax.lax.dot_general(qh, kh, contract_last,
                                preferred_element_type=jnp.float32)   # (tq, S)
        s = s - jnp.max(s, axis=-1, keepdims=True)
        if bf16_exp:
            e = jnp.exp(s.astype(jnp.bfloat16))           # bf16 EUP exp
            denom = jnp.sum(e.astype(jnp.float32), axis=-1, keepdims=True)
            probs = e * pl.reciprocal(denom, approx=True).astype(jnp.bfloat16)
        else:
            e = jnp.exp(s)                                # f32 exp (v5e path)
            inv = pl.reciprocal(jnp.sum(e, axis=-1, keepdims=True), approx=True)
            probs = (e * inv).astype(jnp.bfloat16)
        ctx_scr[:, sl] = jnp.dot(probs, vh,
                                 preferred_element_type=jnp.float32
                                 ).astype(jnp.bfloat16)

    ctx = ctx_scr[...]                                    # (tq, A) bf16

    # --- BertSelfOutput: dense + (optional dense2) residual + LayerNorm -----
    out = jnp.dot(ctx, wo_ref[...],
                  preferred_element_type=jnp.float32) + bo_ref[...]
    if rescale:
        resid = jnp.dot(x_bf, w2_ref[...],
                        preferred_element_type=jnp.float32) + b2_ref[...]
    else:
        resid = x_f32
    h_sum = out + resid
    mu = jnp.mean(h_sum, axis=-1, keepdims=True)
    var = jnp.mean((h_sum - mu) ** 2, axis=-1, keepdims=True)
    y = (h_sum - mu) * jax.lax.rsqrt(var + eps) * gamma_ref[...] + beta_ref[...]
    o_ref[0] = y.astype(o_ref.dtype)


def _pick_q_tile(S):
    # Prefer 256-row query tiles (fills the 256-wide v6e/v7x MXU; S == 256 no
    # longer falls back to 128), else 128, else the full sequence.
    for t in (256, 128):
        if S >= t and S % t == 0:
            return t
    return S


def _build_call(B, S, Hin, A, tq, weights, *, num_heads, head_size, eps,
                rescale, bf16_exp, single_buffer_weights):
    nq = S // tq

    def const_spec(a):
        nd = a.ndim
        if single_buffer_weights:
            return pl.BlockSpec(a.shape, lambda b, qi, _nd=nd: (0,) * _nd,
                                pipeline_mode=pl.Buffered(1))
        return pl.BlockSpec(a.shape, lambda b, qi, _nd=nd: (0,) * _nd)

    in_specs = [
        pl.BlockSpec((1, tq, Hin), lambda b, qi: (b, qi, 0)),   # x query tile
        pl.BlockSpec((1, S, A), lambda b, qi: (b, 0, 0)),       # K (bf16, full seq)
        pl.BlockSpec((1, S, A), lambda b, qi: (b, 0, 0)),       # V (bf16, full seq)
    ] + [const_spec(a) for a in weights]

    kernel = functools.partial(
        _bert_attention_kernel, num_heads=num_heads, head_size=head_size,
        eps=eps, rescale=rescale, bf16_exp=bf16_exp)

    # --- VMEM budget computed from the actual buffer sizes (+25% headroom). --
    weight_mult = 1 if single_buffer_weights else 2
    weight_bytes = weight_mult * sum(int(a.size) * a.dtype.itemsize
                                     for a in weights)
    block_bytes = (2 * tq * Hin * 4        # x tile       (double buffered, f32)
                   + 2 * 2 * S * A * 2     # K and V      (double buffered, bf16)
                   + 2 * tq * A * 4        # output tile  (double buffered, f32)
                   + tq * A * 2)           # ctx scratch  (bf16)
    needed = weight_bytes + block_bytes
    vmem_limit = int(min(max(needed + needed // 4 + (2 << 20), 32 << 20),
                         100 << 20))

    flops = B * (2 * S * Hin * A              # Q projection
                 + 2 * S * S * A * 2          # scores + probs @ V
                 + 2 * S * A * A              # output dense
                 + (2 * S * Hin * A if rescale else 0))
    cost = pl.CostEstimate(
        flops=int(flops),
        transcendentals=int(B * num_heads * S * S),
        bytes_accessed=int(B * S * Hin * 4 + 2 * B * S * A * 2
                           + B * S * A * 4 + weight_bytes))

    return pl.pallas_call(
        kernel,
        out_shape=jax.ShapeDtypeStruct((B, S, A), jnp.float32),
        grid_spec=pltpu.PrefetchScalarGridSpec(
            num_scalar_prefetch=0,
            grid=(B, nq),
            in_specs=in_specs,
            out_specs=pl.BlockSpec((1, tq, A), lambda b, qi: (b, qi, 0)),
            scratch_shapes=[pltpu.VMEM((tq, A), jnp.bfloat16)]),   # context
        compiler_params=pltpu.CompilerParams(
            dimension_semantics=("parallel", "parallel"),
            vmem_limit_bytes=vmem_limit),
        cost_estimate=cost,
    )


def bert_attention(x, params, *, num_heads, head_size, eps=1e-12):
    """x: (B, S, Hin) float32. Returns (B, S, A), A = num_heads * head_size."""
    B, S, Hin = x.shape
    A = num_heads * head_size
    rescale = (Hin != A)
    tq = _pick_q_tile(S)

    wq, bq, wk, bk, wv, bv, wo, bo, w2, b2, gamma, beta = params
    bf16 = lambda w: w.astype(jnp.bfloat16)

    # K/V projections hoisted to plain XLA GEMMs; kernel consumes bf16 K/V.
    k = (x @ wk + bk[0]).astype(jnp.bfloat16)            # (B, S, A)
    v = (x @ wv + bv[0]).astype(jnp.bfloat16)            # (B, S, A)

    weights = [bf16(wq), bq, bf16(wo), bo]
    if rescale:
        weights += [bf16(w2), b2]                        # dense2 only when used
    weights += [gamma, beta]

    # bf16 EUP exists on v6e/v7x only; keep f32 exp elsewhere (v5e/v5p/v4).
    kind = jax.devices()[0].device_kind.lower()
    bf16_exp = ("v6" in kind) or ("v7" in kind)

    args = (x, k, v, *weights)
    try:
        call = _build_call(B, S, Hin, A, tq, weights, num_heads=num_heads,
                           head_size=head_size, eps=eps, rescale=rescale,
                           bf16_exp=bf16_exp, single_buffer_weights=True)
        return call(*args)
    except Exception:
        # Fallback if this Pallas build rejects pipeline_mode=pl.Buffered(1):
        # retry with default (double) buffering for the constant weight blocks.
        call = _build_call(B, S, Hin, A, tq, weights, num_heads=num_heads,
                           head_size=head_size, eps=eps, rescale=rescale,
                           bf16_exp=bf16_exp, single_buffer_weights=False)
        return call(*args)


def bert_attention_ref(x, params, *, num_heads, head_size, eps=1e-12):
    """Pure-JAX f32 reference mirroring the PyTorch forward."""
    wq, bq, wk, bk, wv, bv, wo, bo, w2, b2, gamma, beta = params
    B, S, Hin = x.shape
    A = num_heads * head_size

    def split_heads(t):  # (B, S, A) -> (B, H, S, d)
        return t.reshape(B, S, num_heads, head_size).transpose(0, 2, 1, 3)

    q = split_heads(x @ wq + bq[0])
    k = split_heads(x @ wk + bk[0])
    v = split_heads(x @ wv + bv[0])
    scores = jnp.einsum("bhqd,bhkd->bhqk", q, k) / math.sqrt(head_size)
    probs = jax.nn.softmax(scores, axis=-1)
    ctx = jnp.einsum("bhqk,bhkd->bhqd", probs, v)
    ctx = ctx.transpose(0, 2, 1, 3).reshape(B, S, A)

    out = ctx @ wo + bo[0]
    resid = (x @ w2 + b2[0]) if Hin != A else x
    h = out + resid
    mu = jnp.mean(h, axis=-1, keepdims=True)
    var = jnp.mean((h - mu) ** 2, axis=-1, keepdims=True)
    return (h - mu) / jnp.sqrt(var + eps) * gamma[0] + beta[0]


if __name__ == "__main__":
    # TODO(synk): attention_mask / head_mask / cross-attention / past_key_value
    # and relative position embeddings are not implemented (default forward
    # path: self-attention, absolute position embeddings, inference dropout).

    def make_params(key, Hin, A, rescale):
        keys = jax.random.split(key, 12)
        s = 0.02
        wq = s * jax.random.normal(keys[0], (Hin, A), jnp.float32)
        bq = s * jax.random.normal(keys[1], (1, A), jnp.float32)
        wk = s * jax.random.normal(keys[2], (Hin, A), jnp.float32)
        bk = s * jax.random.normal(keys[3], (1, A), jnp.float32)
        wv = s * jax.random.normal(keys[4], (Hin, A), jnp.float32)
        bv = s * jax.random.normal(keys[5], (1, A), jnp.float32)
        wo = s * jax.random.normal(keys[6], (A, A), jnp.float32)
        bo = s * jax.random.normal(keys[7], (1, A), jnp.float32)
        if rescale:
            w2 = s * jax.random.normal(keys[8], (Hin, A), jnp.float32)
            b2 = s * jax.random.normal(keys[9], (1, A), jnp.float32)
        else:
            w2, b2 = None, None
        gamma = jnp.ones((1, A), jnp.float32)
        beta = jnp.zeros((1, A), jnp.float32)
        return (wq, bq, wk, bk, wv, bv, wo, bo, w2, b2, gamma, beta)

    key = jax.random.PRNGKey(0)

    # Config 1: hidden_size (32) != all_head_size (128) -> dense2/rescale path,
    # lane-dense (A = 128) output.
    B, S, Hin, H, D = 2, 8, 32, 2, 64
    A = H * D
    k0, k1 = jax.random.split(key)
    x1 = jax.random.normal(k0, (B, S, Hin), dtype=jnp.float32)
    p1 = make_params(k1, Hin, A, rescale=True)
    out1 = jax.block_until_ready(bert_attention(x1, p1, num_heads=H, head_size=D))
    ref1 = bert_attention_ref(x1, p1, num_heads=H, head_size=D)
    assert out1.shape == (B, S, A), out1.shape
    err1 = float(jnp.max(jnp.abs(out1 - ref1)))
    assert err1 < 3e-2, err1   # bf16 matmuls -> looser tolerance vs f32 ref

    # Config 2: hidden_size == all_head_size -> identity residual path
    # (w2/b2 dropped from the pallas_call entirely).
    Hin2 = A
    k2, k3 = jax.random.split(k1)
    x2 = jax.random.normal(k2, (B, S, Hin2), dtype=jnp.float32)
    p2 = make_params(k3, Hin2, A, rescale=False)
    out2 = jax.block_until_ready(bert_attention(x2, p2, num_heads=H, head_size=D))
    ref2 = bert_attention_ref(x2, p2, num_heads=H, head_size=D)
    assert out2.shape == (B, S, A), out2.shape
    err2 = float(jnp.max(jnp.abs(out2 - ref2)))
    assert err2 < 3e-2, err2

    print("KERNEL_OK")
</pallas_src>

<mosaic_0001>
module attributes {stable_mosaic.version = 11 : i64} {
  func.func @_bert_attention_kernel(%arg0: i32, %arg1: i32, %arg2: memref<1x8x32xf32, #tpu.memory_space<vmem>>, %arg3: memref<1x8x128xbf16, #tpu.memory_space<vmem>>, %arg4: memref<1x8x128xbf16, #tpu.memory_space<vmem>>, %arg5: memref<32x128xbf16, #tpu.memory_space<vmem>>, %arg6: memref<1x128xf32, #tpu.memory_space<vmem>>, %arg7: memref<128x128xbf16, #tpu.memory_space<vmem>>, %arg8: memref<1x128xf32, #tpu.memory_space<vmem>>, %arg9: memref<32x128xbf16, #tpu.memory_space<vmem>>, %arg10: memref<1x128xf32, #tpu.memory_space<vmem>>, %arg11: memref<1x128xf32, #tpu.memory_space<vmem>>, %arg12: memref<1x128xf32, #tpu.memory_space<vmem>>, %arg13: memref<1x8x128xf32, #tpu.memory_space<vmem>>, %arg14: memref<8x128xbf16, #tpu.memory_space<vmem>>) attributes {dimension_semantics = [#tpu.dimension_semantics<parallel>, #tpu.dimension_semantics<parallel>], iteration_bounds = array<i64: 2, 1>, scalar_prefetch = 0 : i64, scratch_operands = 1 : i64, tpu.core_type = #tpu.core_type<tc>, window_params = [{transform_indices = @transform_0, window_bounds = array<i64: 1, 8, 32>}, {transform_indices = @transform_1, window_bounds = array<i64: 1, 8, 128>}, {transform_indices = @transform_2, window_bounds = array<i64: 1, 8, 128>}, {pipeline_mode = #tpu.pipeline_mode<synchronous>, transform_indices = @transform_3, window_bounds = array<i64: 32, 128>}, {pipeline_mode = #tpu.pipeline_mode<synchronous>, transform_indices = @transform_4, window_bounds = array<i64: 1, 128>}, {pipeline_mode = #tpu.pipeline_mode<synchronous>, transform_indices = @transform_5, window_bounds = array<i64: 128, 128>}, {pipeline_mode = #tpu.pipeline_mode<synchronous>, transform_indices = @transform_6, window_bounds = array<i64: 1, 128>}, {pipeline_mode = #tpu.pipeline_mode<synchronous>, transform_indices = @transform_7, window_bounds = array<i64: 32, 128>}, {pipeline_mode = #tpu.pipeline_mode<synchronous>, transform_indices = @transform_8, window_bounds = array<i64: 1, 128>}, {pipeline_mode = #tpu.pipeline_mode<synchronous>, transform_indices = @transform_9, window_bounds = array<i64: 1, 128>}, {pipeline_mode = #tpu.pipeline_mode<synchronous>, transform_indices = @transform_10, window_bounds = array<i64: 1, 128>}, {transform_indices = @transform_11, window_bounds = array<i64: 1, 8, 128>}]} {
    %c0 = arith.constant 0 : index
    %c0_0 = arith.constant 0 : index
    %c0_1 = arith.constant 0 : index
    %0 = vector.load %arg2[%c0, %c0_0, %c0_1] : memref<1x8x32xf32, #tpu.memory_space<vmem>>, vector<1x8x32xf32>
    %1 = vector.shape_cast %0 : vector<1x8x32xf32> to vector<8x32xf32>
    %2 = arith.truncf %1 : vector<8x32xf32> to vector<8x32xbf16>
    %c0_2 = arith.constant 0 : index
    %c0_3 = arith.constant 0 : index
    %3 = vector.load %arg5[%c0_2, %c0_3] : memref<32x128xbf16, #tpu.memory_space<vmem>>, vector<32x128xbf16>
    %cst = arith.constant dense<0.000000e+00> : vector<8x128xf32>
    %4 = tpu.matmul %2, %3, %cst {dimension_numbers = #tpu.dot_dimension_numbers<[1], [0], [0], [1], [0, 0, 1, 1], [], []>} : vector<8x32xbf16>, vector<32x128xbf16>, vector<8x128xf32> -> vector<8x128xf32>
    %c0_4 = arith.constant 0 : index
    %c0_5 = arith.constant 0 : index
    %5 = vector.load %arg6[%c0_4, %c0_5] : memref<1x128xf32, #tpu.memory_space<vmem>>, vector<1x128xf32>
    %6 = vector.broadcast %5 : vector<1x128xf32> to vector<8x128xf32>
    %7 = arith.addf %4, %6 : vector<8x128xf32>
    %cst_6 = arith.constant 1.250000e-01 : f32
    %8 = vector.broadcast %cst_6 : f32 to vector<8x128xf32>
    %9 = arith.mulf %7, %8 : vector<8x128xf32>
    %10 = arith.truncf %9 : vector<8x128xf32> to vector<8x128xbf16>
    %11 = vector.extract_strided_slice %10 {offsets = [0, 0], sizes = [8, 64], strides = [1, 1]} : vector<8x128xbf16> to vector<8x64xbf16>
    %c0_7 = arith.constant 0 : index
    %c0_8 = arith.constant 0 : index
    %c0_9 = arith.constant 0 : index
    %12 = vector.load %arg3[%c0_7, %c0_8, %c0_9] : memref<1x8x128xbf16, #tpu.memory_space<vmem>>, vector<1x8x64xbf16>
    %13 = vector.shape_cast %12 : vector<1x8x64xbf16> to vector<8x64xbf16>
    %c0_10 = arith.constant 0 : index
    %c0_11 = arith.constant 0 : index
    %c0_12 = arith.constant 0 : index
    %14 = vector.load %arg4[%c0_10, %c0_11, %c0_12] : memref<1x8x128xbf16, #tpu.memory_space<vmem>>, vector<1x8x64xbf16>
    %15 = vector.shape_cast %14 : vector<1x8x64xbf16> to vector<8x64xbf16>
    %cst_13 = arith.constant dense<0.000000e+00> : vector<8x8xf32>
    %16 = tpu.matmul %11, %13, %cst_13 {dimension_numbers = #tpu.dot_dimension_numbers<[1], [1], [0], [0], [0, 0, 1, 0], [], []>} : vector<8x64xbf16>, vector<8x64xbf16>, vector<8x8xf32> -> vector<8x8xf32>
    %cst_14 = arith.constant dense<0xFF800000> : vector<8xf32>
    %17 = vector.multi_reduction <maximumf>, %16, %cst_14 [1] : vector<8x8xf32> to vector<8xf32>
    %18 = vector.shape_cast %17 : vector<8xf32> to vector<8x1xf32>
    %19 = vector.broadcast %18 : vector<8x1xf32> to vector<8x8xf32>
    %20 = arith.subf %16, %19 : vector<8x8xf32>
    %21 = math.exp %20 : vector<8x8xf32>
    %cst_15 = arith.constant dense<0.000000e+00> : vector<8xf32>
    %22 = vector.multi_reduction <add>, %21, %cst_15 [1] : vector<8x8xf32> to vector<8xf32>
    %23 = vector.shape_cast %22 : vector<8xf32> to vector<8x1xf32>
    %24 = tpu.reciprocal %23 {approx = true} : vector<8x1xf32> -> vector<8x1xf32>
    %25 = vector.broadcast %24 : vector<8x1xf32> to vector<8x8xf32>
    %26 = arith.mulf %21, %25 : vector<8x8xf32>
    %27 = arith.truncf %26 : vector<8x8xf32> to vector<8x8xbf16>
    %cst_16 = arith.constant dense<0.000000e+00> : vector<8x64xf32>
    %28 = tpu.matmul %27, %15, %cst_16 {dimension_numbers = #tpu.dot_dimension_numbers<[1], [0], [0], [1], [0, 0, 1, 1], [], []>} : vector<8x8xbf16>, vector<8x64xbf16>, vector<8x64xf32> -> vector<8x64xf32>
    %29 = arith.truncf %28 : vector<8x64xf32> to vector<8x64xbf16>
    %c0_17 = arith.constant 0 : index
    %c0_18 = arith.constant 0 : index
    %30 = vector.load %arg14[%c0_17, %c0_18] : memref<8x128xbf16, #tpu.memory_space<vmem>>, vector<8x64xbf16>
    tpu.vector_store %arg14[%c0_17, %c0_18], %29 {strides = array<i32>} : memref<8x128xbf16, #tpu.memory_space<vmem>>, vector<8x64xbf16>,
    %31 = vector.extract_strided_slice %10 {offsets = [0, 64], sizes = [8, 64], strides = [1, 1]} : vector<8x128xbf16> to vector<8x64xbf16>
    %c0_19 = arith.constant 0 : index
    %c0_20 = arith.constant 0 : index
    %c64 = arith.constant 64 : index
    %32 = vector.load %arg3[%c0_19, %c0_20, %c64] : memref<1x8x128xbf16, #tpu.memory_space<vmem>>, vector<1x8x64xbf16>
    %33 = vector.shape_cast %32 : vector<1x8x64xbf16> to vector<8x64xbf16>
    %c0_21 = arith.constant 0 : index
    %c0_22 = arith.constant 0 : index
    %c64_23 = arith.constant 64 : index
    %34 = vector.load %arg4[%c0_21, %c0_22, %c64_23] : memref<1x8x128xbf16, #tpu.memory_space<vmem>>, vector<1x8x64xbf16>
    %35 = vector.shape_cast %34 : vector<1x8x64xbf16> to vector<8x64xbf16>
    %cst_24 = arith.constant dense<0.000000e+00> : vector<8x8xf32>
    %36 = tpu.matmul %31, %33, %cst_24 {dimension_numbers = #tpu.dot_dimension_numbers<[1], [1], [0], [0], [0, 0, 1, 0], [], []>} : vector<8x64xbf16>, vector<8x64xbf16>, vector<8x8xf32> -> vector<8x8xf32>
    %cst_25 = arith.constant dense<0xFF800000> : vector<8xf32>
    %37 = vector.multi_reduction <maximumf>, %36, %cst_25 [1] : vector<8x8xf32> to vector<8xf32>
    %38 = vector.shape_cast %37 : vector<8xf32> to vector<8x1xf32>
    %39 = vector.broadcast %38 : vector<8x1xf32> to vector<8x8xf32>
    %40 = arith.subf %36, %39 : vector<8x8xf32>
    %41 = math.exp %40 : vector<8x8xf32>
    %cst_26 = arith.constant dense<0.000000e+00> : vector<8xf32>
    %42 = vector.multi_reduction <add>, %41, %cst_26 [1] : vector<8x8xf32> to vector<8xf32>
    %43 = vector.shape_cast %42 : vector<8xf32> to vector<8x1xf32>
    %44 = tpu.reciprocal %43 {approx = true} : vector<8x1xf32> -> vector<8x1xf32>
    %45 = vector.broadcast %44 : vector<8x1xf32> to vector<8x8xf32>
    %46 = arith.mulf %41, %45 : vector<8x8xf32>
    %47 = arith.truncf %46 : vector<8x8xf32> to vector<8x8xbf16>
    %cst_27 = arith.constant dense<0.000000e+00> : vector<8x64xf32>
    %48 = tpu.matmul %47, %35, %cst_27 {dimension_numbers = #tpu.dot_dimension_numbers<[1], [0], [0], [1], [0, 0, 1, 1], [], []>} : vector<8x8xbf16>, vector<8x64xbf16>, vector<8x64xf32> -> vector<8x64xf32>
    %49 = arith.truncf %48 : vector<8x64xf32> to vector<8x64xbf16>
    %c0_28 = arith.constant 0 : index
    %c64_29 = arith.constant 64 : index
    %50 = vector.load %arg14[%c0_28, %c64_29] : memref<8x128xbf16, #tpu.memory_space<vmem>>, vector<8x64xbf16>
    tpu.vector_store %arg14[%c0_28, %c64_29], %49 {strides = array<i32>} : memref<8x128xbf16, #tpu.memory_space<vmem>>, vector<8x64xbf16>,
    %c0_30 = arith.constant 0 : index
    %c0_31 = arith.constant 0 : index
    %51 = vector.load %arg14[%c0_30, %c0_31] : memref<8x128xbf16, #tpu.memory_space<vmem>>, vector<8x128xbf16>
    %c0_32 = arith.constant 0 : index
    %c0_33 = arith.constant 0 : index
    %52 = vector.load %arg7[%c0_32, %c0_33] : memref<128x128xbf16, #tpu.memory_space<vmem>>, vector<128x128xbf16>
    %cst_34 = arith.constant dense<0.000000e+00> : vector<8x128xf32>
    %53 = tpu.matmul %51, %52, %cst_34 {dimension_numbers = #tpu.dot_dimension_numbers<[1], [0], [0], [1], [0, 0, 1, 1], [], []>} : vector<8x128xbf16>, vector<128x128xbf16>, vector<8x128xf32> -> vector<8x128xf32>
    %c0_35 = arith.constant 0 : index
    %c0_36 = arith.constant 0 : index
    %54 = vector.load %arg8[%c0_35, %c0_36] : memref<1x128xf32, #tpu.memory_space<vmem>>, vector<1x128xf32>
    %55 = vector.broadcast %54 : vector<1x128xf32> to vector<8x128xf32>
    %56 = arith.addf %53, %55 : vector<8x128xf32>
    %c0_37 = arith.constant 0 : index
    %c0_38 = arith.constant 0 : index
    %57 = vector.load %arg9[%c0_37, %c0_38] : memref<32x128xbf16, #tpu.memory_space<vmem>>, vector<32x128xbf16>
    %cst_39 = arith.constant dense<0.000000e+00> : vector<8x128xf32>
    %58 = tpu.matmul %2, %57, %cst_39 {dimension_numbers = #tpu.dot_dimension_numbers<[1], [0], [0], [1], [0, 0, 1, 1], [], []>} : vector<8x32xbf16>, vector<32x128xbf16>, vector<8x128xf32> -> vector<8x128xf32>
    %c0_40 = arith.constant 0 : index
    %c0_41 = arith.constant 0 : index
    %59 = vector.load %arg10[%c0_40, %c0_41] : memref<1x128xf32, #tpu.memory_space<vmem>>, vector<1x128xf32>
    %60 = vector.broadcast %59 : vector<1x128xf32> to vector<8x128xf32>
    %61 = arith.addf %58, %60 : vector<8x128xf32>
    %62 = arith.addf %56, %61 : vector<8x128xf32>
    %cst_42 = arith.constant dense<0.000000e+00> : vector<8xf32>
    %63 = vector.multi_reduction <add>, %62, %cst_42 [1] : vector<8x128xf32> to vector<8xf32>
    %64 = vector.shape_cast %63 : vector<8xf32> to vector<8x1xf32>
    %cst_43 = arith.constant 1.280000e+02 : f32
    %65 = vector.broadcast %cst_43 : f32 to vector<8x1xf32>
    %66 = arith.divf %64, %65 : vector<8x1xf32>
    %67 = vector.broadcast %66 : vector<8x1xf32> to vector<8x128xf32>
    %68 = arith.subf %62, %67 : vector<8x128xf32>
    %69 = arith.mulf %68, %68 : vector<8x128xf32>
    %cst_44 = arith.constant dense<0.000000e+00> : vector<8xf32>
    %70 = vector.multi_reduction <add>, %69, %cst_44 [1] : vector<8x128xf32> to vector<8xf32>
    %71 = vector.shape_cast %70 : vector<8xf32> to vector<8x1xf32>
    %cst_45 = arith.constant 1.280000e+02 : f32
    %72 = vector.broadcast %cst_45 : f32 to vector<8x1xf32>
    %73 = arith.divf %71, %72 : vector<8x1xf32>
    %74 = vector.broadcast %66 : vector<8x1xf32> to vector<8x128xf32>
    %75 = arith.subf %62, %74 : vector<8x128xf32>
    %cst_46 = arith.constant 9.99999996E-13 : f32
    %76 = vector.broadcast %cst_46 : f32 to vector<8x1xf32>
    %77 = arith.addf %73, %76 : vector<8x1xf32>
    %78 = math.rsqrt %77 : vector<8x1xf32>
    %79 = vector.broadcast %78 : vector<8x1xf32> to vector<8x128xf32>
    %80 = arith.mulf %75, %79 : vector<8x128xf32>
    %c0_47 = arith.constant 0 : index
    %c0_48 = arith.constant 0 : index
    %81 = vector.load %arg11[%c0_47, %c0_48] : memref<1x128xf32, #tpu.memory_space<vmem>>, vector<1x128xf32>
    %82 = vector.broadcast %81 : vector<1x128xf32> to vector<8x128xf32>
    %83 = arith.mulf %80, %82 : vector<8x128xf32>
    %c0_49 = arith.constant 0 : index
    %c0_50 = arith.constant 0 : index
    %84 = vector.load %arg12[%c0_49, %c0_50] : memref<1x128xf32, #tpu.memory_space<vmem>>, vector<1x128xf32>
    %85 = vector.broadcast %84 : vector<1x128xf32> to vector<8x128xf32>
    %86 = arith.addf %83, %85 : vector<8x128xf32>
    %c0_51 = arith.constant 0 : index
    %c0_52 = arith.constant 0 : index
    %c0_53 = arith.constant 0 : index
    %87 = vector.load %arg13[%c0_51, %c0_52, %c0_53] : memref<1x8x128xf32, #tpu.memory_space<vmem>>, vector<1x8x128xf32>
    %88 = vector.shape_cast %87 : vector<1x8x128xf32> to vector<8x128xf32>
    %89 = vector.shape_cast %86 : vector<8x128xf32> to vector<1x8x128xf32>
    tpu.vector_store %arg13[%c0_51, %c0_52, %c0_53], %89 {strides = array<i32>} : memref<1x8x128xf32, #tpu.memory_space<vmem>>, vector<1x8x128xf32>,
    return
  }
  func.func @transform_0(%arg0: i32, %arg1: i32) -> (i32, i32, i32) {
    %c0_i32 = arith.constant 0 : i32
    %c0_i32_0 = arith.constant 0 : i32
    return %arg0, %arg1, %c0_i32 : i32, i32, i32
  }
  func.func @transform_1(%arg0: i32, %arg1: i32) -> (i32, i32, i32) {
    %c0_i32 = arith.constant 0 : i32
    %c0_i32_0 = arith.constant 0 : i32
    %c0_i32_1 = arith.constant 0 : i32
    return %arg0, %c0_i32, %c0_i32_0 : i32, i32, i32
  }
  func.func @transform_2(%arg0: i32, %arg1: i32) -> (i32, i32, i32) {
    %c0_i32 = arith.constant 0 : i32
    %c0_i32_0 = arith.constant 0 : i32
    %c0_i32_1 = arith.constant 0 : i32
    return %arg0, %c0_i32, %c0_i32_0 : i32, i32, i32
  }
  func.func @transform_3(%arg0: i32, %arg1: i32) -> (i32, i32) {
    %c0_i32 = arith.constant 0 : i32
    %c0_i32_0 = arith.constant 0 : i32
    %c0_i32_1 = arith.constant 0 : i32
    return %c0_i32, %c0_i32_0 : i32, i32
  }
  func.func @transform_4(%arg0: i32, %arg1: i32) -> (i32, i32) {
    %c0_i32 = arith.constant 0 : i32
    %c0_i32_0 = arith.constant 0 : i32
    %c0_i32_1 = arith.constant 0 : i32
    return %c0_i32, %c0_i32_0 : i32, i32
  }
  func.func @transform_5(%arg0: i32, %arg1: i32) -> (i32, i32) {
    %c0_i32 = arith.constant 0 : i32
    %c0_i32_0 = arith.constant 0 : i32
    %c0_i32_1 = arith.constant 0 : i32
    return %c0_i32, %c0_i32_0 : i32, i32
  }
  func.func @transform_6(%arg0: i32, %arg1: i32) -> (i32, i32) {
    %c0_i32 = arith.constant 0 : i32
    %c0_i32_0 = arith.constant 0 : i32
    %c0_i32_1 = arith.constant 0 : i32
    return %c0_i32, %c0_i32_0 : i32, i32
  }
  func.func @transform_7(%arg0: i32, %arg1: i32) -> (i32, i32) {
    %c0_i32 = arith.constant 0 : i32
    %c0_i32_0 = arith.constant 0 : i32
    %c0_i32_1 = arith.constant 0 : i32
    return %c0_i32, %c0_i32_0 : i32, i32
  }
  func.func @transform_8(%arg0: i32, %arg1: i32) -> (i32, i32) {
    %c0_i32 = arith.constant 0 : i32
    %c0_i32_0 = arith.constant 0 : i32
    %c0_i32_1 = arith.constant 0 : i32
    return %c0_i32, %c0_i32_0 : i32, i32
  }
  func.func @transform_9(%arg0: i32, %arg1: i32) -> (i32, i32) {
    %c0_i32 = arith.constant 0 : i32
    %c0_i32_0 = arith.constant 0 : i32
    %c0_i32_1 = arith.constant 0 : i32
    return %c0_i32, %c0_i32_0 : i32, i32
  }
  func.func @transform_10(%arg0: i32, %arg1: i32) -> (i32, i32) {
    %c0_i32 = arith.constant 0 : i32
    %c0_i32_0 = arith.constant 0 : i32
    %c0_i32_1 = arith.constant 0 : i32
    return %c0_i32, %c0_i32_0 : i32, i32
  }
  func.func @transform_11(%arg0: i32, %arg1: i32) -> (i32, i32, i32) {
    %c0_i32 = arith.constant 0 : i32
    %c0_i32_0 = arith.constant 0 : i32
    return %arg0, %arg1, %c0_i32 : i32, i32, i32
  }
}

module attributes {stable_mosaic.version = 11 : i64} {
  func.func @_bert_attention_kernel(%arg0: i32, %arg1: i32, %arg2: memref<1x8x32xf32, #tpu.memory_space<vmem>>, %arg3: memref<1x8x128xbf16, #tpu.memory_space<vmem>>, %arg4: memref<1x8x128xbf16, #tpu.memory_space<vmem>>, %arg5: memref<32x128xbf16, #tpu.memory_space<vmem>>, %arg6: memref<1x128xf32, #tpu.memory_space<vmem>>, %arg7: memref<128x128xbf16, #tpu.memory_space<vmem>>, %arg8: memref<1x128xf32, #tpu.memory_space<vmem>>, %arg9: memref<32x128xbf16, #tpu.memory_space<vmem>>, %arg10: memref<1x128xf32, #tpu.memory_space<vmem>>, %arg11: memref<1x128xf32, #tpu.memory_space<vmem>>, %arg12: memref<1x128xf32, #tpu.memory_space<vmem>>, %arg13: memref<1x8x128xf32, #tpu.memory_space<vmem>>, %arg14: memref<8x128xbf16, #tpu.memory_space<vmem>>) attributes {dimension_semantics = [#tpu.dimension_semantics<parallel>, #tpu.dimension_semantics<parallel>], iteration_bounds = array<i64: 2, 1>, scalar_prefetch = 0 : i64, scratch_operands = 1 : i64, tpu.core_type = #tpu.core_type<tc>, window_params = [{transform_indices = @transform_0, window_bounds = array<i64: 1, 8, 32>}, {transform_indices = @transform_1, window_bounds = array<i64: 1, 8, 128>}, {transform_indices = @transform_2, window_bounds = array<i64: 1, 8, 128>}, {pipeline_mode = #tpu.pipeline_mode<synchronous>, transform_indices = @transform_3, window_bounds = array<i64: 32, 128>}, {pipeline_mode = #tpu.pipeline_mode<synchronous>, transform_indices = @transform_4, window_bounds = array<i64: 1, 128>}, {pipeline_mode = #tpu.pipeline_mode<synchronous>, transform_indices = @transform_5, window_bounds = array<i64: 128, 128>}, {pipeline_mode = #tpu.pipeline_mode<synchronous>, transform_indices = @transform_6, window_bounds = array<i64: 1, 128>}, {pipeline_mode = #tpu.pipeline_mode<synchronous>, transform_indices = @transform_7, window_bounds = array<i64: 32, 128>}, {pipeline_mode = #tpu.pipeline_mode<synchronous>, transform_indices = @transform_8, window_bounds = array<i64: 1, 128>}, {pipeline_mode = #tpu.pipeline_mode<synchronous>, transform_indices = @transform_9, window_bounds = array<i64: 1, 128>}, {pipeline_mode = #tpu.pipeline_mode<synchronous>, transform_indices = @transform_10, window_bounds = array<i64: 1, 128>}, {transform_indices = @transform_11, window_bounds = array<i64: 1, 8, 128>}]} {
    %c0 = arith.constant 0 : index
    %c0_0 = arith.constant 0 : index
    %c0_1 = arith.constant 0 : index
    %0 = vector.load %arg2[%c0, %c0_0, %c0_1] : memref<1x8x32xf32, #tpu.memory_space<vmem>>, vector<1x8x32xf32>
    %1 = vector.shape_cast %0 : vector<1x8x32xf32> to vector<8x32xf32>
    %2 = arith.truncf %1 : vector<8x32xf32> to vector<8x32xbf16>
    %c0_2 = arith.constant 0 : index
    %c0_3 = arith.constant 0 : index
    %3 = vector.load %arg5[%c0_2, %c0_3] : memref<32x128xbf16, #tpu.memory_space<vmem>>, vector<32x128xbf16>
    %cst = arith.constant dense<0.000000e+00> : vector<8x128xf32>
    %4 = tpu.matmul %2, %3, %cst {dimension_numbers = #tpu.dot_dimension_numbers<[1], [0], [0], [1], [0, 0, 1, 1], [], []>} : vector<8x32xbf16>, vector<32x128xbf16>, vector<8x128xf32> -> vector<8x128xf32>
    %c0_4 = arith.constant 0 : index
    %c0_5 = arith.constant 0 : index
    %5 = vector.load %arg6[%c0_4, %c0_5] : memref<1x128xf32, #tpu.memory_space<vmem>>, vector<1x128xf32>
    %6 = vector.broadcast %5 : vector<1x128xf32> to vector<8x128xf32>
    %7 = arith.addf %4, %6 : vector<8x128xf32>
    %cst_6 = arith.constant 1.250000e-01 : f32
    %8 = vector.broadcast %cst_6 : f32 to vector<8x128xf32>
    %9 = arith.mulf %7, %8 : vector<8x128xf32>
    %10 = arith.truncf %9 : vector<8x128xf32> to vector<8x128xbf16>
    %11 = vector.extract_strided_slice %10 {offsets = [0, 0], sizes = [8, 64], strides = [1, 1]} : vector<8x128xbf16> to vector<8x64xbf16>
    %c0_7 = arith.constant 0 : index
    %c0_8 = arith.constant 0 : index
    %c0_9 = arith.constant 0 : index
    %12 = vector.load %arg3[%c0_7, %c0_8, %c0_9] : memref<1x8x128xbf16, #tpu.memory_space<vmem>>, vector<1x8x64xbf16>
    %13 = vector.shape_cast %12 : vector<1x8x64xbf16> to vector<8x64xbf16>
    %c0_10 = arith.constant 0 : index
    %c0_11 = arith.constant 0 : index
    %c0_12 = arith.constant 0 : index
    %14 = vector.load %arg4[%c0_10, %c0_11, %c0_12] : memref<1x8x128xbf16, #tpu.memory_space<vmem>>, vector<1x8x64xbf16>
    %15 = vector.shape_cast %14 : vector<1x8x64xbf16> to vector<8x64xbf16>
    %cst_13 = arith.constant dense<0.000000e+00> : vector<8x8xf32>
    %16 = tpu.matmul %11, %13, %cst_13 {dimension_numbers = #tpu.dot_dimension_numbers<[1], [1], [0], [0], [0, 0, 1, 0], [], []>} : vector<8x64xbf16>, vector<8x64xbf16>, vector<8x8xf32> -> vector<8x8xf32>
    %cst_14 = arith.constant dense<0xFF800000> : vector<8xf32>
    %17 = vector.multi_reduction <maximumf>, %16, %cst_14 [1] : vector<8x8xf32> to vector<8xf32>
    %18 = vector.shape_cast %17 : vector<8xf32> to vector<8x1xf32>
    %19 = vector.broadcast %18 : vector<8x1xf32> to vector<8x8xf32>
    %20 = arith.subf %16, %19 : vector<8x8xf32>
    %21 = math.exp %20 : vector<8x8xf32>
    %cst_15 = arith.constant dense<0.000000e+00> : vector<8xf32>
    %22 = vector.multi_reduction <add>, %21, %cst_15 [1] : vector<8x8xf32> to vector<8xf32>
    %23 = vector.shape_cast %22 : vector<8xf32> to vector<8x1xf32>
    %24 = tpu.reciprocal %23 {approx = true} : vector<8x1xf32> -> vector<8x1xf32>
    %25 = vector.broadcast %24 : vector<8x1xf32> to vector<8x8xf32>
    %26 = arith.mulf %21, %25 : vector<8x8xf32>
    %27 = arith.truncf %26 : vector<8x8xf32> to vector<8x8xbf16>
    %cst_16 = arith.constant dense<0.000000e+00> : vector<8x64xf32>
    %28 = tpu.matmul %27, %15, %cst_16 {dimension_numbers = #tpu.dot_dimension_numbers<[1], [0], [0], [1], [0, 0, 1, 1], [], []>} : vector<8x8xbf16>, vector<8x64xbf16>, vector<8x64xf32> -> vector<8x64xf32>
    %29 = arith.truncf %28 : vector<8x64xf32> to vector<8x64xbf16>
    %c0_17 = arith.constant 0 : index
    %c0_18 = arith.constant 0 : index
    %30 = vector.load %arg14[%c0_17, %c0_18] : memref<8x128xbf16, #tpu.memory_space<vmem>>, vector<8x64xbf16>
    tpu.vector_store %arg14[%c0_17, %c0_18], %29 {strides = array<i32>} : memref<8x128xbf16, #tpu.memory_space<vmem>>, vector<8x64xbf16>,
    %31 = vector.extract_strided_slice %10 {offsets = [0, 64], sizes = [8, 64], strides = [1, 1]} : vector<8x128xbf16> to vector<8x64xbf16>
    %c0_19 = arith.constant 0 : index
    %c0_20 = arith.constant 0 : index
    %c64 = arith.constant 64 : index
    %32 = vector.load %arg3[%c0_19, %c0_20, %c64] : memref<1x8x128xbf16, #tpu.memory_space<vmem>>, vector<1x8x64xbf16>
    %33 = vector.shape_cast %32 : vector<1x8x64xbf16> to vector<8x64xbf16>
    %c0_21 = arith.constant 0 : index
    %c0_22 = arith.constant 0 : index
    %c64_23 = arith.constant 64 : index
    %34 = vector.load %arg4[%c0_21, %c0_22, %c64_23] : memref<1x8x128xbf16, #tpu.memory_space<vmem>>, vector<1x8x64xbf16>
    %35 = vector.shape_cast %34 : vector<1x8x64xbf16> to vector<8x64xbf16>
    %cst_24 = arith.constant dense<0.000000e+00> : vector<8x8xf32>
    %36 = tpu.matmul %31, %33, %cst_24 {dimension_numbers = #tpu.dot_dimension_numbers<[1], [1], [0], [0], [0, 0, 1, 0], [], []>} : vector<8x64xbf16>, vector<8x64xbf16>, vector<8x8xf32> -> vector<8x8xf32>
    %cst_25 = arith.constant dense<0xFF800000> : vector<8xf32>
    %37 = vector.multi_reduction <maximumf>, %36, %cst_25 [1] : vector<8x8xf32> to vector<8xf32>
    %38 = vector.shape_cast %37 : vector<8xf32> to vector<8x1xf32>
    %39 = vector.broadcast %38 : vector<8x1xf32> to vector<8x8xf32>
    %40 = arith.subf %36, %39 : vector<8x8xf32>
    %41 = math.exp %40 : vector<8x8xf32>
    %cst_26 = arith.constant dense<0.000000e+00> : vector<8xf32>
    %42 = vector.multi_reduction <add>, %41, %cst_26 [1] : vector<8x8xf32> to vector<8xf32>
    %43 = vector.shape_cast %42 : vector<8xf32> to vector<8x1xf32>
    %44 = tpu.reciprocal %43 {approx = true} : vector<8x1xf32> -> vector<8x1xf32>
    %45 = vector.broadcast %44 : vector<8x1xf32> to vector<8x8xf32>
    %46 = arith.mulf %41, %45 : vector<8x8xf32>
    %47 = arith.truncf %46 : vector<8x8xf32> to vector<8x8xbf16>
    %cst_27 = arith.constant dense<0.000000e+00> : vector<8x64xf32>
    %48 = tpu.matmul %47, %35, %cst_27 {dimension_numbers = #tpu.dot_dimension_numbers<[1], [0], [0], [1], [0, 0, 1, 1], [], []>} : vector<8x8xbf16>, vector<8x64xbf16>, vector<8x64xf32> -> vector<8x64xf32>
    %49 = arith.truncf %48 : vector<8x64xf32> to vector<8x64xbf16>
    %c0_28 = arith.constant 0 : index
    %c64_29 = arith.constant 64 : index
    %50 = vector.load %arg14[%c0_28, %c64_29] : memref<8x128xbf16, #tpu.memory_space<vmem>>, vector<8x64xbf16>
    tpu.vector_store %arg14[%c0_28, %c64_29], %49 {strides = array<i32>} : memref<8x128xbf16, #tpu.memory_space<vmem>>, vector<8x64xbf16>,
    %c0_30 = arith.constant 0 : index
    %c0_31 = arith.constant 0 : index
    %51 = vector.load %arg14[%c0_30, %c0_31] : memref<8x128xbf16, #tpu.memory_space<vmem>>, vector<8x128xbf16>
    %c0_32 = arith.constant 0 : index
    %c0_33 = arith.constant 0 : index
    %52 = vector.load %arg7[%c0_32, %c0_33] : memref<128x128xbf16, #tpu.memory_space<vmem>>, vector<128x128xbf16>
    %cst_34 = arith.constant dense<0.000000e+00> : vector<8x128xf32>
    %53 = tpu.matmul %51, %52, %cst_34 {dimension_numbers = #tpu.dot_dimension_numbers<[1], [0], [0], [1], [0, 0, 1, 1], [], []>} : vector<8x128xbf16>, vector<128x128xbf16>, vector<8x128xf32> -> vector<8x128xf32>
    %c0_35 = arith.constant 0 : index
    %c0_36 = arith.constant 0 : index
    %54 = vector.load %arg8[%c0_35, %c0_36] : memref<1x128xf32, #tpu.memory_space<vmem>>, vector<1x128xf32>
    %55 = vector.broadcast %54 : vector<1x128xf32> to vector<8x128xf32>
    %56 = arith.addf %53, %55 : vector<8x128xf32>
    %c0_37 = arith.constant 0 : index
    %c0_38 = arith.constant 0 : index
    %57 = vector.load %arg9[%c0_37, %c0_38] : memref<32x128xbf16, #tpu.memory_space<vmem>>, vector<32x128xbf16>
    %cst_39 = arith.constant dense<0.000000e+00> : vector<8x128xf32>
    %58 = tpu.matmul %2, %57, %cst_39 {dimension_numbers = #tpu.dot_dimension_numbers<[1], [0], [0], [1], [0, 0, 1, 1], [], []>} : vector<8x32xbf16>, vector<32x128xbf16>, vector<8x128xf32> -> vector<8x128xf32>
    %c0_40 = arith.constant 0 : index
    %c0_41 = arith.constant 0 : index
    %59 = vector.load %arg10[%c0_40, %c0_41] : memref<1x128xf32, #tpu.memory_space<vmem>>, vector<1x128xf32>
    %60 = vector.broadcast %59 : vector<1x128xf32> to vector<8x128xf32>
    %61 = arith.addf %58, %60 : vector<8x128xf32>
    %62 = arith.addf %56, %61 : vector<8x128xf32>
    %cst_42 = arith.constant dense<0.000000e+00> : vector<8xf32>
    %63 = vector.multi_reduction <add>, %62, %cst_42 [1] : vector<8x128xf32> to vector<8xf32>
    %64 = vector.shape_cast %63 : vector<8xf32> to vector<8x1xf32>
    %cst_43 = arith.constant 1.280000e+02 : f32
    %65 = vector.broadcast %cst_43 : f32 to vector<8x1xf32>
    %66 = arith.divf %64, %65 : vector<8x1xf32>
    %67 = vector.broadcast %66 : vector<8x1xf32> to vector<8x128xf32>
    %68 = arith.subf %62, %67 : vector<8x128xf32>
    %69 = arith.mulf %68, %68 : vector<8x128xf32>
    %cst_44 = arith.constant dense<0.000000e+00> : vector<8xf32>
    %70 = vector.multi_reduction <add>, %69, %cst_44 [1] : vector<8x128xf32> to vector<8xf32>
    %71 = vector.shape_cast %70 : vector<8xf32> to vector<8x1xf32>
    %cst_45 = arith.constant 1.280000e+02 : f32
    %72 = vector.broadcast %cst_45 : f32 to vector<8x1xf32>
    %73 = arith.divf %71, %72 : vector<8x1xf32>
    %74 = vector.broadcast %66 : vector<8x1xf32> to vector<8x128xf32>
    %75 = arith.subf %62, %74 : vector<8x128xf32>
    %cst_46 = arith.constant 9.99999996E-13 : f32
    %76 = vector.broadcast %cst_46 : f32 to vector<8x1xf32>
    %77 = arith.addf %73, %76 : vector<8x1xf32>
    %78 = math.rsqrt %77 : vector<8x1xf32>
    %79 = vector.broadcast %78 : vector<8x1xf32> to vector<8x128xf32>
    %80 = arith.mulf %75, %79 : vector<8x128xf32>
    %c0_47 = arith.constant 0 : index
    %c0_48 = arith.constant 0 : index
    %81 = vector.load %arg11[%c0_47, %c0_48] : memref<1x128xf32, #tpu.memory_space<vmem>>, vector<1x128xf32>
    %82 = vector.broadcast %81 : vector<1x128xf32> to vector<8x128xf32>
    %83 = arith.mulf %80, %82 : vector<8x128xf32>
    %c0_49 = arith.constant 0 : index
    %c0_50 = arith.constant 0 : index
    %84 = vector.load %arg12[%c0_49, %c0_50] : memref<1x128xf32, #tpu.memory_space<vmem>>, vector<1x128xf32>
    %85 = vector.broadcast %84 : vector<1x128xf32> to vector<8x128xf32>
    %86 = arith.addf %83, %85 : vector<8x128xf32>
    %c0_51 = arith.constant 0 : index
    %c0_52 = arith.constant 0 : index
    %c0_53 = arith.constant 0 : index
    %87 = vector.load %arg13[%c0_51, %c0_52, %c0_53] : memref<1x8x128xf32, #tpu.memory_space<vmem>>, vector<1x8x128xf32>
    %88 = vector.shape_cast %87 : vector<1x8x128xf32> to vector<8x128xf32>
    %89 = vector.shape_cast %86 : vector<8x128xf32> to vector<1x8x128xf32>
    tpu.vector_store %arg13[%c0_51, %c0_52, %c0_53], %89 {strides = array<i32>} : memref<1x8x128xf32, #tpu.memory_space<vmem>>, vector<1x8x128xf32>,
    return
  }
  func.func @transform_0(%arg0: i32, %arg1: i32) -> (i32, i32, i32) {
    %c0_i32 = arith.constant 0 : i32
    %c0_i32_0 = arith.constant 0 : i32
    return %arg0, %arg1, %c0_i32 : i32, i32, i32
  }
  func.func @transform_1(%arg0: i32, %arg1: i32) -> (i32, i32, i32) {
    %c0_i32 = arith.constant 0 : i32
    %c0_i32_0 = arith.constant 0 : i32
    %c0_i32_1 = arith.constant 0 : i32
    return %arg0, %c0_i32, %c0_i32_0 : i32, i32, i32
  }
  func.func @transform_2(%arg0: i32, %arg1: i32) -> (i32, i32, i32) {
    %c0_i32 = arith.constant 0 : i32
    %c0_i32_0 = arith.constant 0 : i32
    %c0_i32_1 = arith.constant 0 : i32
    return %arg0, %c0_i32, %c0_i32_0 : i32, i32, i32
  }
  func.func @transform_3(%arg0: i32, %arg1: i32) -> (i32, i32) {
    %c0_i32 = arith.constant 0 : i32
    %c0_i32_0 = arith.constant 0 : i32
    %c0_i32_1 = arith.constant 0 : i32
    return %c0_i32, %c0_i32_0 : i32, i32
  }
  func.func @transform_4(%arg0: i32, %arg1: i32) -> (i32, i32) {
    %c0_i32 = arith.constant 0 : i32
    %c0_i32_0 = arith.constant 0 : i32
    %c0_i32_1 = arith.constant 0 : i32
    return %c0_i32, %c0_i32_0 : i32, i32
  }
  func.func @transform_5(%arg0: i32, %arg1: i32) -> (i32, i32) {
    %c0_i32 = arith.constant 0 : i32
    %c0_i32_0 = arith.constant 0 : i32
    %c0_i32_1 = arith.constant 0 : i32
    return %c0_i32, %c0_i32_0 : i32, i32
  }
  func.func @transform_6(%arg0: i32, %arg1: i32) -> (i32, i32) {
    %c0_i32 = arith.constant 0 : i32
    %c0_i32_0 = arith.constant 0 : i32
    %c0_i32_1 = arith.constant 0 : i32
    return %c0_i32, %c0_i32_0 : i32, i32
  }
  func.func @transform_7(%arg0: i32, %arg1: i32) -> (i32, i32) {
    %c0_i32 = arith.constant 0 : i32
    %c0_i32_0 = arith.constant 0 : i32
    %c0_i32_1 = arith.constant 0 : i32
    return %c0_i32, %c0_i32_0 : i32, i32
  }
  func.func @transform_8(%arg0: i32, %arg1: i32) -> (i32, i32) {
    %c0_i32 = arith.constant 0 : i32
    %c0_i32_0 = arith.constant 0 : i32
    %c0_i32_1 = arith.constant 0 : i32
    return %c0_i32, %c0_i32_0 : i32, i32
  }
  func.func @transform_9(%arg0: i32, %arg1: i32) -> (i32, i32) {
    %c0_i32 = arith.constant 0 : i32
    %c0_i32_0 = arith.constant 0 : i32
    %c0_i32_1 = arith.constant 0 : i32
    return %c0_i32, %c0_i32_0 : i32, i32
  }
  func.func @transform_10(%arg0: i32, %arg1: i32) -> (i32, i32) {
    %c0_i32 = arith.constant 0 : i32
    %c0_i32_0 = arith.constant 0 : i32
    %c0_i32_1 = arith.constant 0 : i32
    return %c0_i32, %c0_i32_0 : i32, i32
  }
  func.func @transform_11(%arg0: i32, %arg1: i32) -> (i32, i32, i32) {
    %c0_i32 = arith.constant 0 : i32
    %c0_i32_0 = arith.constant 0 : i32
    return %arg0, %arg1, %c0_i32 : i32, i32, i32
  }
}

</mosaic_0001>

<llo_original>
// kernel: tpu_custom_call.1
$region0: #{tpu_custom_call.1}
  #allocation0 [shape = 'u32[]', space=smem, size = 0x4, offset = 0x4, fixed_abs, tag = 'smem constant byte address 0x4 - core index']
  #allocation1 [shape = 'u32[144,128]{1,0:T(1,128)}', space=vmem, size = 0x12000, scoped, tag = 'internal scratch']
  #allocation2 [shape = 'bf16[8,128]{1,0:T(8,128)(2,1)}', space=vmem, size = 0x800, scoped, tag = 'scratch operand']
  %s0 = inlined_call_operand.hbm [shape: f32[2,8,32], index: 0, kind: input, shape index: {}]
  %s1 = inlined_call_operand.hbm [shape: bf16[2,8,128], index: 1, kind: input, shape index: {}]
  %s2 = inlined_call_operand.hbm [shape: bf16[2,8,128], index: 2, kind: input, shape index: {}]
  %s3 = inlined_call_operand.hbm [shape: bf16[32,128], index: 3, kind: input, shape index: {}]
  %s4 = inlined_call_operand.vmem [shape: f32[1,128], index: 4, kind: input, shape index: {}]
  %s5 = inlined_call_operand.hbm [shape: bf16[128,128], index: 5, kind: input, shape index: {}]
  %s6 = inlined_call_operand.vmem [shape: f32[1,128], index: 6, kind: input, shape index: {}]
  %s7 = inlined_call_operand.vmem [shape: bf16[32,128], index: 7, kind: input, shape index: {}]
  %s8 = inlined_call_operand.vmem [shape: f32[1,128], index: 8, kind: input, shape index: {}]
  %s9 = inlined_call_operand.vmem [shape: f32[1,128], index: 9, kind: input, shape index: {}]
  %s10 = inlined_call_operand.vmem [shape: f32[1,128], index: 10, kind: input, shape index: {}]
  %s11 = inlined_call_operand.hbm [shape: f32[2,8,128], index: 11, kind: output, shape index: {}]
  %s12 = sld [smem:[#allocation0]]
  $region97: #{tpu_custom_call.1} parent=0
    _
  %s14 = ssub.s32 1, %s12
  %s15 = scalar_select 0, %s14, %s12
  $region1: #{tpu_custom_call.1} parent=0
    #allocation3 [shape = 'u8[8192]{0}', space=vmem, size = 0x2000, scoped, tag = 'input window, operand 0']
    #allocation4 [shape = 's32[2]{0}', space=sflag, size = 0x8, scoped, tag = 'scoped memory for tpu_custom_call.1']
    #allocation5 [shape = 's32[2]{0}', space=sflag, size = 0x8, scoped, tag = 'scoped memory for tpu_custom_call.1']
    #allocation6 [shape = 'u8[4096]{0}', space=vmem, size = 0x1000, scoped, tag = 'input window, operand 1']
    #allocation7 [shape = 's32[2]{0}', space=sflag, size = 0x8, scoped, tag = 'scoped memory for tpu_custom_call.1']
    #allocation8 [shape = 'u8[4096]{0}', space=vmem, size = 0x1000, scoped, tag = 'input window, operand 2']
    #allocation9 [shape = 'u8[8192]{0}', space=vmem, size = 0x2000, scoped, tag = 'input window, operand 3, single buffered']
    #allocation10 [shape = 's32[1]{0}', space=sflag, size = 0x4, scoped, tag = 'scoped memory for tpu_custom_call.1']
    #allocation11 [shape = 'u8[32768]{0}', space=vmem, size = 0x8000, scoped, tag = 'input window, operand 5, single buffered']
    #allocation12 [shape = 'u8[8192]{0}', space=vmem, size = 0x2000, scoped, tag = 'output window, operand 0']
    %16 = vsyncpa [#allocation4], 0
    %s17 = scalar_lea.sflag [#allocation4], 1
    %18 = vsyncpa %s17, 0
    %19 = vsyncpa [#allocation7], 0
    %s20 = scalar_lea.sflag [#allocation7], 1
    %21 = vsyncpa %s20, 0
    %22 = vsyncpa [#allocation10], 0
    %23 = vsyncpa [#allocation5], 0
    %s24 = scalar_lea.sflag [#allocation5], 1
    %25 = vsyncpa %s24, 0
    loop: start=0, step=1, limit=4
    $region2: #{tpu_custom_call.1} parent=1 // loop_pre_header
      _
    $region3: #{tpu_custom_call.1} parent=1 // loop_header
      %s27 = sphi 0, %s31
      %p28 = scmp.ge.s32.totalorder %s27, 4
      %s34 = sphi 0, %s46
      %s35 = sphi 0, %s42
      %s36 = sphi 0, %s34
      %s37 = sphi 0, %s35
      %s38 = sphi 0, %s36
      %s39 = sphi 0, %s37
      %s51 = sphi 0, %s53
      %s54 = sphi 0, %s51
      %s55 = sphi 0, %s54
      %s71 = sphi 0, %s55
      %s77 = sphi 0, %s79
      %s80 = sphi 0, %s77
      %s81 = sphi 0, %s80
      %s97 = sphi 0, %s81
      %s103 = sphi 0, %s105
      %s106 = sphi 0, %s103
      %s107 = sphi 0, %s106
      %s123 = sphi 0, %s107
      %s127 = sphi 0, %s127
      %s129 = sphi 0, %s127
      %s130 = sphi 0, %s129
      %s144 = sphi 0, %s130
      %s148 = sphi 0, %s148
      %s150 = sphi 0, %s148
      %s151 = sphi 0, %s150
      %s165 = sphi 0, %s151
      %s169 = sphi 0, %s169
      %s171 = sphi 0, %s169
      %s172 = sphi 0, %s171
      %s186 = sphi 0, %s172
      %s190 = sphi 0, %s190
      %s192 = sphi 0, %s190
      %s193 = sphi 0, %s192
      %s207 = sphi 0, %s193
      %s211 = sphi 0, %s211
      %s213 = sphi 0, %s211
      %s214 = sphi 0, %s213
      %s228 = sphi 0, %s214
      %s232 = sphi 0, %s232
      %s234 = sphi 0, %s232
      %s235 = sphi 0, %s234
      %s249 = sphi 0, %s235
      %s253 = sphi 0, %s253
      %s255 = sphi 0, %s253
      %s256 = sphi 0, %s255
      %s270 = sphi 0, %s256
      %s274 = sphi 0, %s274
      %s276 = sphi 0, %s274
      %s277 = sphi 0, %s276
      %s291 = sphi 0, %s277
      %s299 = sphi 0, %s301
      %s302 = sphi 0, %s299
      %s303 = sphi 0, %s302
      %s319 = sphi 0, %s303
    $region4: #{tpu_custom_call.1} parent=1 // loop_header_branch
      %30 = sbr.rel (%p28) target = $region8
    $region5: #{tpu_custom_call.1} parent=1 // loop_body
      %s32 = ssub.s32 %s27, 1
      %s33 = ssub.s32 %s27, 2
      %s40 = sadd.s32 1, %s35
      %p41 = scmp.ge.s32.totalorder %s40, 1
      %s42 = scalar_select %p41, 0, %s40
      %s43 = sadd.s32 1, %s34
      %s44 = scalar_select %p41, %s43, %s34
      %p45 = scmp.ge.s32.totalorder %s44, 2
      %s46 = scalar_select %p45, 0, %s44
      %s47 = ssub.s32 %s34, %s46
      %s48 = ssub.s32 %s35, %s42
      %s49 = sor.u32 %s47, %s48
      %p50 = scmp.eq.s32.totalorder %s49, 0
      %s52 = sadd.s32 %s51, 1
      %s53 = scalar_select %p50, %s51, %s52
      %p56 = pneg %p50
      %p57 = scmp.eq.s32.totalorder %s27, 1
      %p58 = por %p56, %p57
      %p59 = scmp.ne.s32.totalorder %s51, %s54
      %p60 = scmp.eq.s32.totalorder %s27, 0
      %p61 = por %p59, %p60
      %p62 = scmp.ne.s32.totalorder %s51, %s54
      %p63 = scmp.eq.s32.totalorder %s32, 1
      %p64 = por %p62, %p63
      %p65 = scmp.ne.s32.totalorder %s54, %s55
      %p66 = scmp.eq.s32.totalorder %s32, 0
      %p67 = por %p65, %p66
      %p68 = scmp.ne.s32.totalorder %s54, %s55
      %p69 = scmp.eq.s32.totalorder %s33, 1
      %p70 = por %p68, %p69
      %p72 = scmp.ne.s32.totalorder %s55, %s71
      %p73 = scmp.eq.s32.totalorder %s33, 0
      %p74 = por %p72, %p73
      %s75 = ssub.s32 %s34, %s46
      %p76 = scmp.eq.s32.totalorder %s75, 0
      %s78 = sadd.s32 %s77, 1
      %s79 = scalar_select %p76, %s77, %s78
      %p82 = pneg %p76
      %p83 = scmp.eq.s32.totalorder %s27, 1
      %p84 = por %p82, %p83
      %p85 = scmp.ne.s32.totalorder %s77, %s80
      %p86 = scmp.eq.s32.totalorder %s27, 0
      %p87 = por %p85, %p86
      %p88 = scmp.ne.s32.totalorder %s77, %s80
      %p89 = scmp.eq.s32.totalorder %s32, 1
      %p90 = por %p88, %p89
      %p91 = scmp.ne.s32.totalorder %s80, %s81
      %p92 = scmp.eq.s32.totalorder %s32, 0
      %p93 = por %p91, %p92
      %p94 = scmp.ne.s32.totalorder %s80, %s81
      %p95 = scmp.eq.s32.totalorder %s33, 1
      %p96 = por %p94, %p95
      %p98 = scmp.ne.s32.totalorder %s81, %s97
      %p99 = scmp.eq.s32.totalorder %s33, 0
      %p100 = por %p98, %p99
      %s101 = ssub.s32 %s34, %s46
      %p102 = scmp.eq.s32.totalorder %s101, 0
      %s104 = sadd.s32 %s103, 1
      %s105 = scalar_select %p102, %s103, %s104
      %p108 = pneg %p102
      %p109 = scmp.eq.s32.totalorder %s27, 1
      %p110 = por %p108, %p109
      %p111 = scmp.ne.s32.totalorder %s103, %s106
      %p112 = scmp.eq.s32.totalorder %s27, 0
      %p113 = por %p111, %p112
      %p114 = scmp.ne.s32.totalorder %s103, %s106
      %p115 = scmp.eq.s32.totalorder %s32, 1
      %p116 = por %p114, %p115
      %p117 = scmp.ne.s32.totalorder %s106, %s107
      %p118 = scmp.eq.s32.totalorder %s32, 0
      %p119 = por %p117, %p118
      %p120 = scmp.ne.s32.totalorder %s106, %s107
      %p121 = scmp.eq.s32.totalorder %s33, 1
      %p122 = por %p120, %p121
      %p124 = scmp.ne.s32.totalorder %s107, %s123
      %p125 = scmp.eq.s32.totalorder %s33, 0
      %p126 = por %p124, %p125
      %s128 = sadd.s32 %s127, 1
      %p131 = scmp.eq.s32.totalorder %s27, 1
      %p132 = scmp.ne.s32.totalorder %s127, %s129
      %p133 = scmp.eq.s32.totalorder %s27, 0
      %p134 = por %p132, %p133
      %p135 = scmp.ne.s32.totalorder %s127, %s129
      %p136 = scmp.eq.s32.totalorder %s32, 1
      %p137 = por %p135, %p136
      %p138 = scmp.ne.s32.totalorder %s129, %s130
      %p139 = scmp.eq.s32.totalorder %s32, 0
      %p140 = por %p138, %p139
      %p141 = scmp.ne.s32.totalorder %s129, %s130
      %p142 = scmp.eq.s32.totalorder %s33, 1
      %p143 = por %p141, %p142
      %p145 = scmp.ne.s32.totalorder %s130, %s144
      %p146 = scmp.eq.s32.totalorder %s33, 0
      %p147 = por %p145, %p146
      %s149 = sadd.s32 %s148, 1
      %p152 = scmp.eq.s32.totalorder %s27, 1
      %p153 = scmp.ne.s32.totalorder %s148, %s150
      %p154 = scmp.eq.s32.totalorder %s27, 0
      %p155 = por %p153, %p154
      %p156 = scmp.ne.s32.totalorder %s148, %s150
      %p157 = scmp.eq.s32.totalorder %s32, 1
      %p158 = por %p156, %p157
      %p159 = scmp.ne.s32.totalorder %s150, %s151
      %p160 = scmp.eq.s32.totalorder %s32, 0
      %p161 = por %p159, %p160
      %p162 = scmp.ne.s32.totalorder %s150, %s151
      %p163 = scmp.eq.s32.totalorder %s33, 1
      %p164 = por %p162, %p163
      %p166 = scmp.ne.s32.totalorder %s151, %s165
      %p167 = scmp.eq.s32.totalorder %s33, 0
      %p168 = por %p166, %p167
      %s170 = sadd.s32 %s169, 1
      %p173 = scmp.eq.s32.totalorder %s27, 1
      %p174 = scmp.ne.s32.totalorder %s169, %s171
      %p175 = scmp.eq.s32.totalorder %s27, 0
      %p176 = por %p174, %p175
      %p177 = scmp.ne.s32.totalorder %s169, %s171
      %p178 = scmp.eq.s32.totalorder %s32, 1
      %p179 = por %p177, %p178
      %p180 = scmp.ne.s32.totalorder %s171, %s172
      %p181 = scmp.eq.s32.totalorder %s32, 0
      %p182 = por %p180, %p181
      %p183 = scmp.ne.s32.totalorder %s171, %s172
      %p184 = scmp.eq.s32.totalorder %s33, 1
      %p185 = por %p183, %p184
      %p187 = scmp.ne.s32.totalorder %s172, %s186
      %p188 = scmp.eq.s32.totalorder %s33, 0
      %p189 = por %p187, %p188
      %s191 = sadd.s32 %s190, 1
      %p194 = scmp.eq.s32.totalorder %s27, 1
      %p195 = scmp.ne.s32.totalorder %s190, %s192
      %p196 = scmp.eq.s32.totalorder %s27, 0
      %p197 = por %p195, %p196
      %p198 = scmp.ne.s32.totalorder %s190, %s192
      %p199 = scmp.eq.s32.totalorder %s32, 1
      %p200 = por %p198, %p199
      %p201 = scmp.ne.s32.totalorder %s192, %s193
      %p202 = scmp.eq.s32.totalorder %s32, 0
      %p203 = por %p201, %p202
      %p204 = scmp.ne.s32.totalorder %s192, %s193
      %p205 = scmp.eq.s32.totalorder %s33, 1
      %p206 = por %p204, %p205
      %p208 = scmp.ne.s32.totalorder %s193, %s207
      %p209 = scmp.eq.s32.totalorder %s33, 0
      %p210 = por %p208, %p209
      %s212 = sadd.s32 %s211, 1
      %p215 = scmp.eq.s32.totalorder %s27, 1
      %p216 = scmp.ne.s32.totalorder %s211, %s213
      %p217 = scmp.eq.s32.totalorder %s27, 0
      %p218 = por %p216, %p217
      %p219 = scmp.ne.s32.totalorder %s211, %s213
      %p220 = scmp.eq.s32.totalorder %s32, 1
      %p221 = por %p219, %p220
      %p222 = scmp.ne.s32.totalorder %s213, %s214
      %p223 = scmp.eq.s32.totalorder %s32, 0
      %p224 = por %p222, %p223
      %p225 = scmp.ne.s32.totalorder %s213, %s214
      %p226 = scmp.eq.s32.totalorder %s33, 1
      %p227 = por %p225, %p226
      %p229 = scmp.ne.s32.totalorder %s214, %s228
      %p230 = scmp.eq.s32.totalorder %s33, 0
      %p231 = por %p229, %p230
      %s233 = sadd.s32 %s232, 1
      %p236 = scmp.eq.s32.totalorder %s27, 1
      %p237 = scmp.ne.s32.totalorder %s232, %s234
      %p238 = scmp.eq.s32.totalorder %s27, 0
      %p239 = por %p237, %p238
      %p240 = scmp.ne.s32.totalorder %s232, %s234
      %p241 = scmp.eq.s32.totalorder %s32, 1
      %p242 = por %p240, %p241
      %p243 = scmp.ne.s32.totalorder %s234, %s235
      %p244 = scmp.eq.s32.totalorder %s32, 0
      %p245 = por %p243, %p244
      %p246 = scmp.ne.s32.totalorder %s234, %s235
      %p247 = scmp.eq.s32.totalorder %s33, 1
      %p248 = por %p246, %p247
      %p250 = scmp.ne.s32.totalorder %s235, %s249
      %p251 = scmp.eq.s32.totalorder %s33, 0
      %p252 = por %p250, %p251
      %s254 = sadd.s32 %s253, 1
      %p257 = scmp.eq.s32.totalorder %s27, 1
      %p258 = scmp.ne.s32.totalorder %s253, %s255
      %p259 = scmp.eq.s32.totalorder %s27, 0
      %p260 = por %p258, %p259
      %p261 = scmp.ne.s32.totalorder %s253, %s255
      %p262 = scmp.eq.s32.totalorder %s32, 1
      %p263 = por %p261, %p262
      %p264 = scmp.ne.s32.totalorder %s255, %s256
      %p265 = scmp.eq.s32.totalorder %s32, 0
      %p266 = por %p264, %p265
      %p267 = scmp.ne.s32.totalorder %s255, %s256
      %p268 = scmp.eq.s32.totalorder %s33, 1
      %p269 = por %p267, %p268
      %p271 = scmp.ne.s32.totalorder %s256, %s270
      %p272 = scmp.eq.s32.totalorder %s33, 0
      %p273 = por %p271, %p272
      %s275 = sadd.s32 %s274, 1
      %p278 = scmp.eq.s32.totalorder %s27, 1
      %p279 = scmp.ne.s32.totalorder %s274, %s276
      %p280 = scmp.eq.s32.totalorder %s27, 0
      %p281 = por %p279, %p280
      %p282 = scmp.ne.s32.totalorder %s274, %s276
      %p283 = scmp.eq.s32.totalorder %s32, 1
      %p284 = por %p282, %p283
      %p285 = scmp.ne.s32.totalorder %s276, %s277
      %p286 = scmp.eq.s32.totalorder %s32, 0
      %p287 = por %p285, %p286
      %p288 = scmp.ne.s32.totalorder %s276, %s277
      %p289 = scmp.eq.s32.totalorder %s33, 1
      %p290 = por %p288, %p289
      %p292 = scmp.ne.s32.totalorder %s277, %s291
      %p293 = scmp.eq.s32.totalorder %s33, 0
      %p294 = por %p292, %p293
      %s295 = ssub.s32 %s34, %s46
      %s296 = ssub.s32 %s35, %s42
      %s297 = sor.u32 %s295, %s296
      %p298 = scmp.eq.s32.totalorder %s297, 0
      %s300 = sadd.s32 %s299, 1
      %s301 = scalar_select %p298, %s299, %s300
      %p304 = pneg %p298
      %p305 = scmp.eq.s32.totalorder %s27, 1
      %p306 = por %p304, %p305
      %p307 = scmp.ne.s32.totalorder %s299, %s302
      %p308 = scmp.eq.s32.totalorder %s27, 0
      %p309 = por %p307, %p308
      %p310 = scmp.ne.s32.totalorder %s299, %s302
      %p311 = scmp.eq.s32.totalorder %s32, 1
      %p312 = por %p310, %p311
      %p313 = scmp.ne.s32.totalorder %s302, %s303
      %p314 = scmp.eq.s32.totalorder %s32, 0
      %p315 = por %p313, %p314
      %p316 = scmp.ne.s32.totalorder %s302, %s303
      %p317 = scmp.eq.s32.totalorder %s33, 1
      %p318 = por %p316, %p317
      %p320 = scmp.ne.s32.totalorder %s303, %s319
      %p321 = scmp.eq.s32.totalorder %s33, 0
      %p322 = por %p320, %p321
      %p323 = scmp.le.s32.totalorder 1, %s27
      %p324 = scmp.lt.s32.totalorder %s27, 3
      %p325 = pnand %p323, %p324
      %p326 = pneg %p325
      // Predicated region
      $region9: #{tpu_custom_call.1} parent=5 // pred_check
        _
      $region10: #{tpu_custom_call.1} parent=5 // pred_check_branch
        %328 = sbr.rel (%p325) target = $region12
      $region11: #{tpu_custom_call.1} parent=5 // pred_region
        %s329 = ssub.s32 %s27, 1
        // Predicated region
        $region13: #{tpu_custom_call.1} parent=11 // pred_check
          %p330 = pneg %p140
        $region14: #{tpu_custom_call.1} parent=11 // pred_check_branch
          %332 = sbr.rel (%p330) target = $region16
        $region15: #{tpu_custom_call.1} parent=11 // pred_region
          %s334 = ssub.s32 256, 256
          %335 = vsyncadd [#allocation10], %s334
          %s336 = sshll.u32 [#allocation9], 4
          %s337 = int_to_ptr.vmem [resolvable:$true] %s336
          %342 = dma.hbm_to_vmem [thread:$0]  %s3, 256, %s337, [#allocation10], 64, 64, 4
        $region16: #{tpu_custom_call.1} parent=11 // pred_fallthru
          _
        // Predicated region
        $region17: #{tpu_custom_call.1} parent=11 // pred_check
          %p343 = pneg %p161
        $region18: #{tpu_custom_call.1} parent=11 // pred_check_branch
          %345 = sbr.rel (%p343) target = $region20
        $region19: #{tpu_custom_call.1} parent=11 // pred_region
          _
        $region20: #{tpu_custom_call.1} parent=11 // pred_fallthru
          _
        // Predicated region
        $region21: #{tpu_custom_call.1} parent=11 // pred_check
          %p346 = pneg %p182
        $region22: #{tpu_custom_call.1} parent=11 // pred_check_branch
          %348 = sbr.rel (%p346) target = $region24
        $region23: #{tpu_custom_call.1} parent=11 // pred_region
          %s350 = ssub.s32 1024, 1024
          %351 = vsyncadd [#allocation10], %s350
          %s352 = sshll.u32 [#allocation11], 4
          %s353 = int_to_ptr.vmem [resolvable:$true] %s352
          %358 = dma.hbm_to_vmem [thread:$0]  %s5, 1024, %s353, [#allocation10], 64, 64, 4
        $region24: #{tpu_custom_call.1} parent=11 // pred_fallthru
          _
        // Predicated region
        $region25: #{tpu_custom_call.1} parent=11 // pred_check
          %p359 = pneg %p203
        $region26: #{tpu_custom_call.1} parent=11 // pred_check_branch
          %361 = sbr.rel (%p359) target = $region28
        $region27: #{tpu_custom_call.1} parent=11 // pred_region
          _
        $region28: #{tpu_custom_call.1} parent=11 // pred_fallthru
          _
        // Predicated region
        $region29: #{tpu_custom_call.1} parent=11 // pred_check
          %p362 = pneg %p224
        $region30: #{tpu_custom_call.1} parent=11 // pred_check_branch
          %364 = sbr.rel (%p362) target = $region32
        $region31: #{tpu_custom_call.1} parent=11 // pred_region
          _
        $region32: #{tpu_custom_call.1} parent=11 // pred_fallthru
          _
        // Predicated region
        $region33: #{tpu_custom_call.1} parent=11 // pred_check
          %p365 = pneg %p245
        $region34: #{tpu_custom_call.1} parent=11 // pred_check_branch
          %367 = sbr.rel (%p365) target = $region36
        $region35: #{tpu_custom_call.1} parent=11 // pred_region
          _
        $region36: #{tpu_custom_call.1} parent=11 // pred_fallthru
          _
        // Predicated region
        $region37: #{tpu_custom_call.1} parent=11 // pred_check
          %p368 = pneg %p266
        $region38: #{tpu_custom_call.1} parent=11 // pred_check_branch
          %370 = sbr.rel (%p368) target = $region40
        $region39: #{tpu_custom_call.1} parent=11 // pred_region
          _
        $region40: #{tpu_custom_call.1} parent=11 // pred_fallthru
          _
        // Predicated region
        $region41: #{tpu_custom_call.1} parent=11 // pred_check
          %p371 = pneg %p287
        $region42: #{tpu_custom_call.1} parent=11 // pred_check_branch
          %373 = sbr.rel (%p371) target = $region44
        $region43: #{tpu_custom_call.1} parent=11 // pred_region
          _
        $region44: #{tpu_custom_call.1} parent=11 // pred_fallthru
          _
      $region12: #{tpu_custom_call.1} parent=5 // pred_fallthru
        _
      %p374 = scmp.lt.s32.totalorder %s27, 2
      // Predicated region
      $region45: #{tpu_custom_call.1} parent=5 // pred_check
        %p375 = pneg %p374
      $region46: #{tpu_custom_call.1} parent=5 // pred_check_branch
        %377 = sbr.rel (%p375) target = $region48
      $region47: #{tpu_custom_call.1} parent=5 // pred_region
        // Predicated region
        $region49: #{tpu_custom_call.1} parent=47 // pred_check
          %p378 = pneg %p61
        $region50: #{tpu_custom_call.1} parent=47 // pred_check_branch
          %380 = sbr.rel (%p378) target = $region52
        $region51: #{tpu_custom_call.1} parent=47 // pred_region
          %s381 = sand.u32 %s51, 1
          %s382 = scalar_lea.sflag [#allocation4], %s381
          %s383 = sand.u32 %s51, 1
          %s384 = smul.addr %s383, 8
          %s385 = scalar_lea.vmem [#allocation3], %s384
          %s387 = ssub.s32 128, 128
          %388 = vsyncadd %s382, %s387
          %s389 = sadd.s32 %s35, %s34
          %s390 = smul.addr %s389, 128
          %s391 = scalar_lea.hbm %s0, %s390
          %s393 = sshll.u32 %s385, 4
          %s394 = int_to_ptr.vmem [resolvable:$true] %s393
          %396 = dma.hbm_to_vmem [thread:$0]  %s391, 128, %s394, %s382
        $region52: #{tpu_custom_call.1} parent=47 // pred_fallthru
          _
        // Predicated region
        $region53: #{tpu_custom_call.1} parent=47 // pred_check
          %p397 = pneg %p87
        $region54: #{tpu_custom_call.1} parent=47 // pred_check_branch
          %399 = sbr.rel (%p397) target = $region56
        $region55: #{tpu_custom_call.1} parent=47 // pred_region
          %s400 = sand.u32 %s27, 1
          %s401 = scalar_lea.sflag [#allocation7], %s400
          %s402 = sand.u32 %s77, 1
          %s403 = smul.addr %s402, 4
          %s404 = scalar_lea.vmem [#allocation6], %s403
          %s406 = ssub.s32 64, 64
          %407 = vsyncadd %s401, %s406
          %s408 = smul.addr %s34, 64
          %s409 = scalar_lea.hbm %s1, %s408
          %s411 = sshll.u32 %s404, 4
          %s412 = int_to_ptr.vmem [resolvable:$true] %s411
          %414 = dma.hbm_to_vmem [thread:$0]  %s409, 64, %s412, %s401
        $region56: #{tpu_custom_call.1} parent=47 // pred_fallthru
          _
        // Predicated region
        $region57: #{tpu_custom_call.1} parent=47 // pred_check
          %p415 = pneg %p113
        $region58: #{tpu_custom_call.1} parent=47 // pred_check_branch
          %417 = sbr.rel (%p415) target = $region60
        $region59: #{tpu_custom_call.1} parent=47 // pred_region
          %s418 = sand.u32 %s27, 1
          %s419 = scalar_lea.sflag [#allocation7], %s418
          %s420 = sand.u32 %s103, 1
          %s421 = smul.addr %s420, 4
          %s422 = scalar_lea.vmem [#allocation8], %s421
          %s424 = ssub.s32 64, 64
          %425 = vsyncadd %s419, %s424
          %s426 = smul.addr %s34, 64
          %s427 = scalar_lea.hbm %s2, %s426
          %s429 = sshll.u32 %s422, 4
          %s430 = int_to_ptr.vmem [resolvable:$true] %s429
          %432 = dma.hbm_to_vmem [thread:$0]  %s427, 64, %s430, %s419
        $region60: #{tpu_custom_call.1} parent=47 // pred_fallthru
          _
      $region48: #{tpu_custom_call.1} parent=5 // pred_fallthru
        _
      %p433 = scmp.le.s32.totalorder 1, %s27
      %p434 = scmp.lt.s32.totalorder %s27, 3
      %p435 = pnand %p433, %p434
      %p436 = pneg %p435
      // Predicated region
      $region61: #{tpu_custom_call.1} parent=5 // pred_check
        _
      $region62: #{tpu_custom_call.1} parent=5 // pred_check_branch
        %438 = sbr.rel (%p435) target = $region64
      $region63: #{tpu_custom_call.1} parent=5 // pred_region
        %s439 = ssub.s32 %s27, 1
        %s440 = sand.u32 %s54, 1
        %s441 = scalar_lea.sflag [#allocation4], %s440
        %s442 = sand.u32 %s54, 1
        %s443 = smul.addr %s442, 8
        %s444 = scalar_lea.vmem [#allocation3], %s443
        // Predicated region
        $region65: #{tpu_custom_call.1} parent=63 // pred_check
          %p445 = pneg %p67
        $region66: #{tpu_custom_call.1} parent=63 // pred_check_branch
          %447 = sbr.rel (%p445) target = $region68
        $region67: #{tpu_custom_call.1} parent=63 // pred_region
          %448 = dma.done %s441, 128
        $region68: #{tpu_custom_call.1} parent=63 // pred_fallthru
          _
        %s449 = sand.u32 %s32, 1
        %s450 = scalar_lea.sflag [#allocation7], %s449
        %s451 = sand.u32 %s80, 1
        %s452 = smul.addr %s451, 4
        %s453 = scalar_lea.vmem [#allocation6], %s452
        // Predicated region
        $region69: #{tpu_custom_call.1} parent=63 // pred_check
          %p454 = pneg %p93
        $region70: #{tpu_custom_call.1} parent=63 // pred_check_branch
          %456 = sbr.rel (%p454) target = $region72
        $region71: #{tpu_custom_call.1} parent=63 // pred_region
          %457 = dma.done %s450, 64
        $region72: #{tpu_custom_call.1} parent=63 // pred_fallthru
          _
        %s458 = sand.u32 %s32, 1
        %s459 = scalar_lea.sflag [#allocation7], %s458
        %s460 = sand.u32 %s106, 1
        %s461 = smul.addr %s460, 4
        %s462 = scalar_lea.vmem [#allocation8], %s461
        // Predicated region
        $region73: #{tpu_custom_call.1} parent=63 // pred_check
          %p463 = pneg %p119
        $region74: #{tpu_custom_call.1} parent=63 // pred_check_branch
          %465 = sbr.rel (%p463) target = $region76
        $region75: #{tpu_custom_call.1} parent=63 // pred_region
          %466 = dma.done %s459, 64
        $region76: #{tpu_custom_call.1} parent=63 // pred_fallthru
          _
        // Predicated region
        $region77: #{tpu_custom_call.1} parent=63 // pred_check
          %p467 = pneg %p140
        $region78: #{tpu_custom_call.1} parent=63 // pred_check_branch
          %469 = sbr.rel (%p467) target = $region80
        $region79: #{tpu_custom_call.1} parent=63 // pred_region
          %470 = dma.done [#allocation10], 256
        $region80: #{tpu_custom_call.1} parent=63 // pred_fallthru
          _
        // Predicated region
        $region81: #{tpu_custom_call.1} parent=63 // pred_check
          %p471 = pneg %p182
        $region82: #{tpu_custom_call.1} parent=63 // pred_check_branch
          %473 = sbr.rel (%p471) target = $region84
        $region83: #{tpu_custom_call.1} parent=63 // pred_region
          %474 = dma.done [#allocation10], 1024
        $region84: #{tpu_custom_call.1} parent=63 // pred_fallthru
          _
        %s475 = sand.u32 %s54, 1
        %s476 = scalar_lea.sflag [#allocation4], %s475
        %s477 = sand.u32 %s54, 1
        %s478 = smul.addr %s477, 8
        %s479 = scalar_lea.vmem [#allocation3], %s478
        %p480 = pneg %p67
        %p481 = pneg %p64
        %s482 = sand.u32 %s32, 1
        %s483 = scalar_lea.sflag [#allocation7], %s482
        %s484 = sand.u32 %s80, 1
        %s485 = smul.addr %s484, 4
        %s486 = scalar_lea.vmem [#allocation6], %s485
        %p487 = pneg %p93
        %p488 = pneg %p90
        %s489 = sand.u32 %s32, 1
        %s490 = scalar_lea.sflag [#allocation7], %s489
        %s491 = sand.u32 %s106, 1
        %s492 = smul.addr %s491, 4
        %s493 = scalar_lea.vmem [#allocation8], %s492
        %p494 = pneg %p119
        %p495 = pneg %p116
        %p496 = pneg %p140
        %p497 = pneg %p137
        %p498 = pneg %p161
        %p499 = pneg %p158
        %p500 = pneg %p182
        %p501 = pneg %p179
        %p502 = pneg %p203
        %p503 = pneg %p200
        %p504 = pneg %p224
        %p505 = pneg %p221
        %p506 = pneg %p245
        %p507 = pneg %p242
        %p508 = pneg %p266
        %p509 = pneg %p263
        %p510 = pneg %p287
        %p511 = pneg %p284
        %p512 = pneg %p315
        %p513 = pneg %p312
        %s514 = sand.u32 %s302, 1
        %s515 = scalar_lea.sflag [#allocation5], %s514
        %s516 = sand.u32 %s302, 1
        %s517 = smul.addr %s516, 8
        %s518 = scalar_lea.vmem [#allocation12], %s517
        %v520 = vld [vmem:[%s444] sm:$0xff]
        %v521 = vpack.c.bf16 %v520, %v520
        %v522 = vld [vmem:[#allocation9] sm:$0xf]
        %v523 = vld [vmem:[#allocation9 + $0x4] sm:$0xf]
        %v524 = vld [vmem:[#allocation9 + $0x8] sm:$0xf]
        %v525 = vld [vmem:[#allocation9 + $0xc] sm:$0xf]
        %v526 = vld [vmem:[%s4] sm:$0x1]
        %v528 = vlaneseq
        %v529 = vshrl.u32 %v528, 7
        %v530 = vsub.s32 0, %v529
        %v531 = vrot.slane %v526, %v530
        %v537 = vunpack.c.l.b16 %v522
        %v538 = vunpack.c.l.b16 %v523
        %v539 = vunpack.c.l.b16 %v524
        %v540 = vunpack.c.l.b16 %v525
        %v541 = vpack.c.b16 %v538, %v537
        %v542 = vpack.c.b16 %v540, %v539
        %vm545 = vcmask 261120
        %v547 = vsel %vm545, %v521, 0
        %549 = vmatprep.subr.bf16.mxu0 0
        %550 = vmatpush1.bf16.msra.mxu0 %v541
        %551 = vmatprep.subr.bf16.mxu0 0
        %552 = vmatpush1.bf16.msra.mxu0 %v542
        %553 = vmatprep.subr.bf16.mxu0 0
        %554 = vmatpush1.bf16.msra.mxu0 0
        %555 = vmatprep.subr.bf16.mxu0 0
        %556 = vmatpush1.bf16.msra.mxu0 0
        %557 = vmatprep.subr.bf16.mxu0 0
        %558 = vmatpush1.bf16.msra.mxu0 0
        %559 = vmatprep.subr.bf16.mxu0 0
        %560 = vmatpush1.bf16.msra.mxu0 0
        %561 = vmatprep.subr.bf16.mxu0 0
        %562 = vmatpush1.bf16.msra.mxu0 0
        %563 = vmatprep.subr.bf16.mxu0 0
        %564 = vmatpush1.bf16.msra.mxu0 0
        %565 = vmatprep.subr.bf16.mxu0 0
        %566 = vmatpush1.bf16.msra.mxu0 0
        %567 = vmatprep.subr.bf16.mxu0 0
        %568 = vmatpush1.bf16.msra.mxu0 0
        %569 = vmatprep.subr.bf16.mxu0 0
        %570 = vmatpush1.bf16.msra.mxu0 0
        %571 = vmatprep.subr.bf16.mxu0 0
        %572 = vmatpush1.bf16.msra.mxu0 0
        %573 = vmatprep.subr.bf16.mxu0 0
        %574 = vmatpush1.bf16.msra.mxu0 0
        %575 = vmatprep.subr.bf16.mxu0 0
        %576 = vmatpush1.bf16.msra.mxu0 0
        %577 = vmatprep.subr.bf16.mxu0 0
        %578 = vmatpush1.bf16.msra.mxu0 0
        %579 = vmatprep.subr.bf16.mxu0 0
        %580 = vmatpush1.bf16.msra.mxu0 0
        %581 = vmatprep.mubr.bf16.mxu0 0
        %582 = vmatmul.mubr.bf16.gmra.mrb[0].mxu0 %v547
        %v583 = vpop.f32.mrb[0].mxu0
        %v584 = vadd.f32 %v531, %v583
        %v585 = vpop.f32.mrb[0].mxu0
        %v586 = vpop.f32.mrb[0].mxu0
        %v587 = vpop.f32.mrb[0].mxu0
        %588 = vdwg.mxu0
        %v589 = vmul.f32 %v584, 0.125
        %v590 = vpack.c.bf16 %v589, %v589
        %v591 = vld [vmem:[%s453] sm:$0xf]
        %v592 = vld [vmem:[%s462] sm:$0xf]
        %vm593 = vcmask 523264
        %v595 = vsel %vm593, %v590, 0
        %v598 = vsel %vm593, %v591, 0
        %600 = vmatprep.subr.bf16.mxu0 0
        %601 = vmatpush1.bf16.xpose.msra.mxu0 %v598
        %602 = vmatprep.subr.bf16.mxu0 0
        %603 = vmatpush1.bf16.xpose.msra.mxu0 0
        %604 = vmatprep.subr.bf16.mxu0 0
        %605 = vmatpush1.bf16.xpose.msra.mxu0 0
        %606 = vmatprep.subr.bf16.mxu0 0
        %607 = vmatpush1.bf16.xpose.msra.mxu0 0
        %608 = vmatprep.subr.bf16.mxu0 0
        %609 = vmatpush1.bf16.xpose.msra.mxu0 0
        %610 = vmatprep.subr.bf16.mxu0 0
        %611 = vmatpush1.bf16.xpose.msra.mxu0 0
        %612 = vmatprep.subr.bf16.mxu0 0
        %613 = vmatpush1.bf16.xpose.msra.mxu0 0
        %614 = vmatprep.subr.bf16.mxu0 0
        %615 = vmatpush1.bf16.xpose.msra.mxu0 0
        %616 = vmatprep.subr.bf16.mxu0 0
        %617 = vmatpush1.bf16.xpose.msra.mxu0 0
        %618 = vmatprep.subr.bf16.mxu0 0
        %619 = vmatpush1.bf16.xpose.msra.mxu0 0
        %620 = vmatprep.subr.bf16.mxu0 0
        %621 = vmatpush1.bf16.xpose.msra.mxu0 0
        %622 = vmatprep.subr.bf16.mxu0 0
        %623 = vmatpush1.bf16.xpose.msra.mxu0 0
        %624 = vmatprep.subr.bf16.mxu0 0
        %625 = vmatpush1.bf16.xpose.msra.mxu0 0
        %626 = vmatprep.subr.bf16.mxu0 0
        %627 = vmatpush1.bf16.xpose.msra.mxu0 0
        %628 = vmatprep.subr.bf16.mxu0 0
        %629 = vmatpush1.bf16.xpose.msra.mxu0 0
        %630 = vmatprep.subr.bf16.mxu0 0
        %631 = vmatpush1.bf16.xpose.msra.mxu0 0
        %632 = vmatprep.mubr.bf16.mxu0 0
        %633 = vmatmul.mubr.bf16.gmra.mrb[0].mxu0 %v595
        %v634 = vpop.f32.mrb[0].mxu0
        %v635 = vadd.f32 0.0, %v634
        %v636 = vpop.f32.mrb[0].mxu0
        %v637 = vpop.f32.mrb[0].mxu0
        %v638 = vpop.f32.mrb[0].mxu0
        %639 = vdwg.mxu0
        %vm640 = vcmask 64512
        %v641 = vsel %vm640, %v635, -inf
        %642 = vmax.xlane.f32.xlu0 %v641
        %v643 = vpop.xlane.xlu0 %642
        %v644 = vsub.f32 %v635, %v643
        %v645 = vmul.f32 %v644, 1.442695
        %v646 = vpow.pop %v645
        %v647 = vsel %vm640, %v646, 0.0
        %648 = vadd.xlane.f32.xlu0 %v647
        %v649 = vpop.xlane.xlu0 %648
        %v650 = vrcp.pop %v649
        %v651 = vmul.f32 %v646, %v650
        %v652 = vpack.c.bf16 %v651, %v651
        %v654 = vsel %vm640, %v652, 0
        %vm656 = vcmask 1043456
        %v658 = vsel %vm656, %v592, 0
        %660 = vmatprep.subr.bf16.mxu0 0
        %661 = vmatpush1.bf16.msra.mxu0 %v658
        %662 = vmatprep.subr.bf16.mxu0 0
        %663 = vmatpush1.bf16.msra.mxu0 0
        %664 = vmatprep.subr.bf16.mxu0 0
        %665 = vmatpush1.bf16.msra.mxu0 0
        %666 = vmatprep.subr.bf16.mxu0 0
        %667 = vmatpush1.bf16.msra.mxu0 0
        %668 = vmatprep.subr.bf16.mxu0 0
        %669 = vmatpush1.bf16.msra.mxu0 0
        %670 = vmatprep.subr.bf16.mxu0 0
        %671 = vmatpush1.bf16.msra.mxu0 0
        %672 = vmatprep.subr.bf16.mxu0 0
        %673 = vmatpush1.bf16.msra.mxu0 0
        %674 = vmatprep.subr.bf16.mxu0 0
        %675 = vmatpush1.bf16.msra.mxu0 0
        %676 = vmatprep.subr.bf16.mxu0 0
        %677 = vmatpush1.bf16.msra.mxu0 0
        %678 = vmatprep.subr.bf16.mxu0 0
        %679 = vmatpush1.bf16.msra.mxu0 0
        %680 = vmatprep.subr.bf16.mxu0 0
        %681 = vmatpush1.bf16.msra.mxu0 0
        %682 = vmatprep.subr.bf16.mxu0 0
        %683 = vmatpush1.bf16.msra.mxu0 0
        %684 = vmatprep.subr.bf16.mxu0 0
        %685 = vmatpush1.bf16.msra.mxu0 0
        %686 = vmatprep.subr.bf16.mxu0 0
        %687 = vmatpush1.bf16.msra.mxu0 0
        %688 = vmatprep.subr.bf16.mxu0 0
        %689 = vmatpush1.bf16.msra.mxu0 0
        %690 = vmatprep.subr.bf16.mxu0 0
        %691 = vmatpush1.bf16.msra.mxu0 0
        %692 = vmatprep.mubr.bf16.mxu0 0
        %693 = vmatmul.mubr.bf16.gmra.mrb[0].mxu0 %v654
        %v694 = vpop.f32.mrb[0].mxu0
        %v695 = vadd.f32 0.0, %v694
        %v696 = vpop.f32.mrb[0].mxu0
        %v697 = vpop.f32.mrb[0].mxu0
        %v698 = vpop.f32.mrb[0].mxu0
        %699 = vdwg.mxu0
        %v700 = vpack.c.bf16 %v695, %v695
        %vm701 = vcmask 519168
        %702 = vst.msk [vmem:[#allocation2] sm:$0xf] %vm701, %v700
        %v703 = vld [vmem:[%s453] sm:$0xf]
        %v704 = vld [vmem:[%s462] sm:$0xf]
        %706 = vrot.lane.b32.xlu0 %v590, 64
        %v707 = vpop.permute.xlu0 %706
        %v709 = vunpack.c.l.b16 %v703
        %v710 = vpack.c.b16 %v709, %v709
        %711 = vrot.lane.b32.xlu0 %v710, 64
        %v712 = vpop.permute.xlu0 %711
        %v714 = vsel %vm593, %v707, 0
        %v717 = vsel %vm593, %v712, 0
        %719 = vmatprep.subr.bf16.mxu0 0
        %720 = vmatpush1.bf16.xpose.msra.mxu0 %v717
        %721 = vmatprep.subr.bf16.mxu0 0
        %722 = vmatpush1.bf16.xpose.msra.mxu0 0
        %723 = vmatprep.subr.bf16.mxu0 0
        %724 = vmatpush1.bf16.xpose.msra.mxu0 0
        %725 = vmatprep.subr.bf16.mxu0 0
        %726 = vmatpush1.bf16.xpose.msra.mxu0 0
        %727 = vmatprep.subr.bf16.mxu0 0
        %728 = vmatpush1.bf16.xpose.msra.mxu0 0
        %729 = vmatprep.subr.bf16.mxu0 0
        %730 = vmatpush1.bf16.xpose.msra.mxu0 0
        %731 = vmatprep.subr.bf16.mxu0 0
        %732 = vmatpush1.bf16.xpose.msra.mxu0 0
        %733 = vmatprep.subr.bf16.mxu0 0
        %734 = vmatpush1.bf16.xpose.msra.mxu0 0
        %735 = vmatprep.subr.bf16.mxu0 0
        %736 = vmatpush1.bf16.xpose.msra.mxu0 0
        %737 = vmatprep.subr.bf16.mxu0 0
        %738 = vmatpush1.bf16.xpose.msra.mxu0 0
        %739 = vmatprep.subr.bf16.mxu0 0
        %740 = vmatpush1.bf16.xpose.msra.mxu0 0
        %741 = vmatprep.subr.bf16.mxu0 0
        %742 = vmatpush1.bf16.xpose.msra.mxu0 0
        %743 = vmatprep.subr.bf16.mxu0 0
        %744 = vmatpush1.bf16.xpose.msra.mxu0 0
        %745 = vmatprep.subr.bf16.mxu0 0
        %746 = vmatpush1.bf16.xpose.msra.mxu0 0
        %747 = vmatprep.subr.bf16.mxu0 0
        %748 = vmatpush1.bf16.xpose.msra.mxu0 0
        %749 = vmatprep.subr.bf16.mxu0 0
        %750 = vmatpush1.bf16.xpose.msra.mxu0 0
        %751 = vmatprep.mubr.bf16.mxu0 0
        %752 = vmatmul.mubr.bf16.gmra.mrb[0].mxu0 %v714
        %v753 = vpop.f32.mrb[0].mxu0
        %v754 = vadd.f32 0.0, %v753
        %v755 = vpop.f32.mrb[0].mxu0
        %v756 = vpop.f32.mrb[0].mxu0
        %v757 = vpop.f32.mrb[0].mxu0
        %758 = vdwg.mxu0
        %v759 = vsel %vm640, %v754, -inf
        %760 = vmax.xlane.f32.xlu0 %v759
        %v761 = vpop.xlane.xlu0 %760
        %v762 = vsub.f32 %v754, %v761
        %v763 = vmul.f32 %v762, 1.442695
        %v764 = vpow.pop %v763
        %v765 = vsel %vm640, %v764, 0.0
        %766 = vadd.xlane.f32.xlu0 %v765
        %v767 = vpop.xlane.xlu0 %766
        %v768 = vrcp.pop %v767
        %v769 = vmul.f32 %v764, %v768
        %v770 = vpack.c.bf16 %v769, %v769
        %v772 = vunpack.c.l.b16 %v704
        %v773 = vpack.c.b16 %v772, %v772
        %774 = vrot.lane.b32.xlu0 %v773, 64
        %v775 = vpop.permute.xlu0 %774
        %v777 = vsel %vm640, %v770, 0
        %v780 = vsel %vm656, %v775, 0
        %782 = vmatprep.subr.bf16.mxu0 0
        %783 = vmatpush1.bf16.msra.mxu0 %v780
        %784 = vmatprep.subr.bf16.mxu0 0
        %785 = vmatpush1.bf16.msra.mxu0 0
        %786 = vmatprep.subr.bf16.mxu0 0
        %787 = vmatpush1.bf16.msra.mxu0 0
        %788 = vmatprep.subr.bf16.mxu0 0
        %789 = vmatpush1.bf16.msra.mxu0 0
        %790 = vmatprep.subr.bf16.mxu0 0
        %791 = vmatpush1.bf16.msra.mxu0 0
        %792 = vmatprep.subr.bf16.mxu0 0
        %793 = vmatpush1.bf16.msra.mxu0 0
        %794 = vmatprep.subr.bf16.mxu0 0
        %795 = vmatpush1.bf16.msra.mxu0 0
        %796 = vmatprep.subr.bf16.mxu0 0
        %797 = vmatpush1.bf16.msra.mxu0 0
        %798 = vmatprep.subr.bf16.mxu0 0
        %799 = vmatpush1.bf16.msra.mxu0 0
        %800 = vmatprep.subr.bf16.mxu0 0
        %801 = vmatpush1.bf16.msra.mxu0 0
        %802 = vmatprep.subr.bf16.mxu0 0
        %803 = vmatpush1.bf16.msra.mxu0 0
        %804 = vmatprep.subr.bf16.mxu0 0
        %805 = vmatpush1.bf16.msra.mxu0 0
        %806 = vmatprep.subr.bf16.mxu0 0
        %807 = vmatpush1.bf16.msra.mxu0 0
        %808 = vmatprep.subr.bf16.mxu0 0
        %809 = vmatpush1.bf16.msra.mxu0 0
        %810 = vmatprep.subr.bf16.mxu0 0
        %811 = vmatpush1.bf16.msra.mxu0 0
        %812 = vmatprep.subr.bf16.mxu0 0
        %813 = vmatpush1.bf16.msra.mxu0 0
        %814 = vmatprep.mubr.bf16.mxu0 0
        %815 = vmatmul.mubr.bf16.gmra.mrb[0].mxu0 %v777
        %v816 = vpop.f32.mrb[0].mxu0
        %v817 = vadd.f32 0.0, %v816
        %v818 = vpop.f32.mrb[0].mxu0
        %v819 = vpop.f32.mrb[0].mxu0
        %v820 = vpop.f32.mrb[0].mxu0
        %821 = vdwg.mxu0
        %v822 = vpack.c.bf16 %v817, %v817
        %v824 = vunpack.c.l.b16 %v822
        %v825 = vpack.c.b16 %v824, %v824
        %826 = vrot.lane.b32.xlu0 %v825, 64
        %v827 = vpop.permute.xlu0 %826
        %vm829 = vcmask 1043968
        %830 = vst.msk [vmem:[#allocation2] sm:$0xf] %vm829, %v827
        %v831 = vld [vmem:[#allocation2] sm:$0xf]
        %v832 = vld [vmem:[#allocation11] sm:$0xf]
        %v833 = vld [vmem:[#allocation11 + $0x4] sm:$0xf]
        %v834 = vld [vmem:[#allocation11 + $0x8] sm:$0xf]
        %v835 = vld [vmem:[#allocation11 + $0xc] sm:$0xf]
        %v836 = vld [vmem:[#allocation11 + $0x10] sm:$0xf]
        %v837 = vld [vmem:[#allocation11 + $0x14] sm:$0xf]
        %v838 = vld [vmem:[#allocation11 + $0x18] sm:$0xf]
        %v839 = vld [vmem:[#allocation11 + $0x1c] sm:$0xf]
        %v840 = vld [vmem:[#allocation11 + $0x20] sm:$0xf]
        %v841 = vld [vmem:[#allocation11 + $0x24] sm:$0xf]
        %v842 = vld [vmem:[#allocation11 + $0x28] sm:$0xf]
        %v843 = vld [vmem:[#allocation11 + $0x2c] sm:$0xf]
        %v844 = vld [vmem:[#allocation11 + $0x30] sm:$0xf]
        %v845 = vld [vmem:[#allocation11 + $0x34] sm:$0xf]
        %v846 = vld [vmem:[#allocation11 + $0x38] sm:$0xf]
        %v847 = vld [vmem:[#allocation11 + $0x3c] sm:$0xf]
        %v848 = vld [vmem:[%s6] sm:$0x1]
        %v850 = vlaneseq
        %v851 = vshrl.u32 %v850, 7
        %v852 = vsub.s32 0, %v851
        %v853 = vrot.slane %v848, %v852
        %v871 = vunpack.c.l.b16 %v832
        %v872 = vunpack.c.l.b16 %v833
        %v873 = vunpack.c.l.b16 %v834
        %v874 = vunpack.c.l.b16 %v835
        %v875 = vunpack.c.l.b16 %v836
        %v876 = vunpack.c.l.b16 %v837
        %v877 = vunpack.c.l.b16 %v838
        %v878 = vunpack.c.l.b16 %v839
        %v879 = vunpack.c.l.b16 %v840
        %v880 = vunpack.c.l.b16 %v841
        %v881 = vunpack.c.l.b16 %v842
        %v882 = vunpack.c.l.b16 %v843
        %v883 = vunpack.c.l.b16 %v844
        %v884 = vunpack.c.l.b16 %v845
        %v885 = vunpack.c.l.b16 %v846
        %v886 = vunpack.c.l.b16 %v847
        %v887 = vpack.c.b16 %v872, %v871
        %v888 = vpack.c.b16 %v874, %v873
        %v889 = vpack.c.b16 %v876, %v875
        %v890 = vpack.c.b16 %v878, %v877
        %v891 = vpack.c.b16 %v880, %v879
        %v892 = vpack.c.b16 %v882, %v881
        %v893 = vpack.c.b16 %v884, %v883
        %v894 = vpack.c.b16 %v886, %v885
        %903 = vmatprep.subr.bf16.mxu0 0
        %904 = vmatpush1.bf16.msra.mxu0 %v887
        %905 = vmatprep.subr.bf16.mxu0 0
        %906 = vmatpush1.bf16.msra.mxu0 %v888
        %907 = vmatprep.subr.bf16.mxu0 0
        %908 = vmatpush1.bf16.msra.mxu0 %v889
        %909 = vmatprep.subr.bf16.mxu0 0
        %910 = vmatpush1.bf16.msra.mxu0 %v890
        %911 = vmatprep.subr.bf16.mxu0 0
        %912 = vmatpush1.bf16.msra.mxu0 %v891
        %913 = vmatprep.subr.bf16.mxu0 0
        %914 = vmatpush1.bf16.msra.mxu0 %v892
        %915 = vmatprep.subr.bf16.mxu0 0
        %916 = vmatpush1.bf16.msra.mxu0 %v893
        %917 = vmatprep.subr.bf16.mxu0 0
        %918 = vmatpush1.bf16.msra.mxu0 %v894
        %919 = vmatprep.subr.bf16.mxu0 0
        %920 = vmatpush1.bf16.msra.mxu0 0
        %921 = vmatprep.subr.bf16.mxu0 0
        %922 = vmatpush1.bf16.msra.mxu0 0
        %923 = vmatprep.subr.bf16.mxu0 0
        %924 = vmatpush1.bf16.msra.mxu0 0
        %925 = vmatprep.subr.bf16.mxu0 0
        %926 = vmatpush1.bf16.msra.mxu0 0
        %927 = vmatprep.subr.bf16.mxu0 0
        %928 = vmatpush1.bf16.msra.mxu0 0
        %929 = vmatprep.subr.bf16.mxu0 0
        %930 = vmatpush1.bf16.msra.mxu0 0
        %931 = vmatprep.subr.bf16.mxu0 0
        %932 = vmatpush1.bf16.msra.mxu0 0
        %933 = vmatprep.subr.bf16.mxu0 0
        %934 = vmatpush1.bf16.msra.mxu0 0
        %935 = vmatprep.mubr.bf16.mxu0 0
        %936 = vmatmul.mubr.bf16.gmra.mrb[0].mxu0 %v831
        %v937 = vpop.f32.mrb[0].mxu0
        %v938 = vadd.f32 %v853, %v937
        %v939 = vpop.f32.mrb[0].mxu0
        %v940 = vpop.f32.mrb[0].mxu0
        %v941 = vpop.f32.mrb[0].mxu0
        %942 = vdwg.mxu0
        %v943 = vld [vmem:[%s7] sm:$0xf]
        %v944 = vld [vmem:[%s7 + $0x4] sm:$0xf]
        %v945 = vld [vmem:[%s7 + $0x8] sm:$0xf]
        %v946 = vld [vmem:[%s7 + $0xc] sm:$0xf]
        %v947 = vld [vmem:[%s8] sm:$0x1]
        %v949 = vlaneseq
        %v950 = vshrl.u32 %v949, 7
        %v951 = vsub.s32 0, %v950
        %v952 = vrot.slane %v947, %v951
        %v958 = vunpack.c.l.b16 %v943
        %v959 = vunpack.c.l.b16 %v944
        %v960 = vunpack.c.l.b16 %v945
        %v961 = vunpack.c.l.b16 %v946
        %v962 = vpack.c.b16 %v959, %v958
        %v963 = vpack.c.b16 %v961, %v960
        %966 = vmatprep.subr.bf16.mxu0 0
        %967 = vmatpush1.bf16.msra.mxu0 %v962
        %968 = vmatprep.subr.bf16.mxu0 0
        %969 = vmatpush1.bf16.msra.mxu0 %v963
        %970 = vmatprep.subr.bf16.mxu0 0
        %971 = vmatpush1.bf16.msra.mxu0 0
        %972 = vmatprep.subr.bf16.mxu0 0
        %973 = vmatpush1.bf16.msra.mxu0 0
        %974 = vmatprep.subr.bf16.mxu0 0
        %975 = vmatpush1.bf16.msra.mxu0 0
        %976 = vmatprep.subr.bf16.mxu0 0
        %977 = vmatpush1.bf16.msra.mxu0 0
        %978 = vmatprep.subr.bf16.mxu0 0
        %979 = vmatpush1.bf16.msra.mxu0 0
        %980 = vmatprep.subr.bf16.mxu0 0
        %981 = vmatpush1.bf16.msra.mxu0 0
        %982 = vmatprep.subr.bf16.mxu0 0
        %983 = vmatpush1.bf16.msra.mxu0 0
        %984 = vmatprep.subr.bf16.mxu0 0
        %985 = vmatpush1.bf16.msra.mxu0 0
        %986 = vmatprep.subr.bf16.mxu0 0
        %987 = vmatpush1.bf16.msra.mxu0 0
        %988 = vmatprep.subr.bf16.mxu0 0
        %989 = vmatpush1.bf16.msra.mxu0 0
        %990 = vmatprep.subr.bf16.mxu0 0
        %991 = vmatpush1.bf16.msra.mxu0 0
        %992 = vmatprep.subr.bf16.mxu0 0
        %993 = vmatpush1.bf16.msra.mxu0 0
        %994 = vmatprep.subr.bf16.mxu0 0
        %995 = vmatpush1.bf16.msra.mxu0 0
        %996 = vmatprep.subr.bf16.mxu0 0
        %997 = vmatpush1.bf16.msra.mxu0 0
        %998 = vmatprep.mubr.bf16.mxu0 0
        %999 = vmatmul.mubr.bf16.gmra.mrb[0].mxu0 %v547
        %v1000 = vpop.f32.mrb[0].mxu0
        %v1001 = vadd.f32 %v952, %v1000
        %v1002 = vpop.f32.mrb[0].mxu0
        %v1003 = vpop.f32.mrb[0].mxu0
        %v1004 = vpop.f32.mrb[0].mxu0
        %1005 = vdwg.mxu0
        %v1006 = vadd.f32 %v938, %v1001
        %1007 = vadd.xlane.f32.xlu0 %v1006
        %v1008 = vpop.xlane.xlu0 %1007
        %v1009 = vrcp.pop 128.0
        %v1010 = vmul.f32 %v1008, %v1009
        %v1011 = vsub.f32 %v1006, %v1010
        %v1012 = vmul.f32 %v1011, %v1011
        %1013 = vadd.xlane.f32.xlu0 %v1012
        %v1014 = vpop.xlane.xlu0 %1013
        %v1015 = vmul.f32 %v1014, %v1009
        %v1016 = vadd.f32 %v1015, 1e-12
        %v1017 = vrsqrt.pop %v1016
        %v1018 = vmul.f32 %v1011, %v1017
        %v1019 = vld [vmem:[%s9] sm:$0x1]
        %v1021 = vlaneseq
        %v1022 = vshrl.u32 %v1021, 7
        %v1023 = vsub.s32 0, %v1022
        %v1024 = vrot.slane %v1019, %v1023
        %v1026 = vmul.f32 %v1018, %v1024
        %v1027 = vld [vmem:[%s10] sm:$0x1]
        %v1029 = vlaneseq
        %v1030 = vshrl.u32 %v1029, 7
        %v1031 = vsub.s32 0, %v1030
        %v1032 = vrot.slane %v1027, %v1031
        %v1034 = vadd.f32 %v1026, %v1032
        %1035 = vst [vmem:[%s518] sm:$0xff] %v1034
        %s1036 = sand.u32 %s302, 1
        %s1037 = scalar_lea.sflag [#allocation5], %s1036
        %s1038 = sand.u32 %s302, 1
        %s1039 = smul.addr %s1038, 8
        %s1040 = scalar_lea.vmem [#allocation12], %s1039
        // Predicated region
        $region85: #{tpu_custom_call.1} parent=63 // pred_check
          %p1041 = pneg %p312
        $region86: #{tpu_custom_call.1} parent=63 // pred_check_branch
          %1043 = sbr.rel (%p1041) target = $region88
        $region87: #{tpu_custom_call.1} parent=63 // pred_region
          %s1045 = ssub.s32 128, 128
          %1046 = vsyncadd %s1037, %s1045
          %s1047 = sadd.s32 %s37, %s36
          %s1048 = smul.addr %s1047, 128
          %s1049 = scalar_lea.hbm %s11, %s1048
          %s1051 = sshll.u32 %s1040, 4
          %s1052 = int_to_ptr.vmem [resolvable:$true] %s1051
          %1054 = dma.vmem_to_hbm [thread:$0]  %s1052, 128, %s1049, %s1037
        $region88: #{tpu_custom_call.1} parent=63 // pred_fallthru
          _
      $region64: #{tpu_custom_call.1} parent=5 // pred_fallthru
        _
      %p1055 = scmp.le.s32.totalorder 2, %s27
      // Predicated region
      $region89: #{tpu_custom_call.1} parent=5 // pred_check
        %p1056 = pneg %p1055
      $region90: #{tpu_custom_call.1} parent=5 // pred_check_branch
        %1058 = sbr.rel (%p1056) target = $region92
      $region91: #{tpu_custom_call.1} parent=5 // pred_region
        %s1059 = ssub.s32 %s27, 2
        // Predicated region
        $region93: #{tpu_custom_call.1} parent=91 // pred_check
          %p1060 = pneg %p318
        $region94: #{tpu_custom_call.1} parent=91 // pred_check_branch
          %1062 = sbr.rel (%p1060) target = $region96
        $region95: #{tpu_custom_call.1} parent=91 // pred_region
          %s1063 = sand.u32 %s303, 1
          %s1064 = scalar_lea.sflag [#allocation5], %s1063
          %s1065 = sand.u32 %s303, 1
          %s1066 = smul.addr %s1065, 8
          %s1067 = scalar_lea.vmem [#allocation12], %s1066
          %1068 = dma.done %s1064, 128
        $region96: #{tpu_custom_call.1} parent=91 // pred_fallthru
          _
      $region92: #{tpu_custom_call.1} parent=5 // pred_fallthru
        _
    $region6: #{tpu_custom_call.1} parent=1 // loop_footer
      %s31 = sadd.s32 1, %s27
    $region7: #{tpu_custom_call.1} parent=1 // loop_footer_branch
      %26 = sbr.rel target = $region3
    $region8: #{tpu_custom_call.1} parent=1 // loop_exit
      _
    %1069 = vsyncpa [#allocation4], 1
    %s1070 = scalar_lea.sflag [#allocation4], 1
    %1071 = vsyncpa %s1070, 1
    %1072 = vsyncpa [#allocation7], 1
    %s1073 = scalar_lea.sflag [#allocation7], 1
    %1074 = vsyncpa %s1073, 1
    %1075 = vsyncpa [#allocation10], 1
    %1076 = vsyncpa [#allocation5], 1
    %s1077 = scalar_lea.sflag [#allocation5], 1
    %1078 = vsyncpa %s1077, 1

// kernel: tpu_custom_call.1
$region0: #{tpu_custom_call.1}
  #allocation0 [shape = 'u32[]', space=smem, size = 0x4, offset = 0x4, fixed_abs, tag = 'smem constant byte address 0x4 - core index']
  #allocation1 [shape = 'u32[144,128]{1,0:T(1,128)}', space=vmem, size = 0x12000, scoped, tag = 'internal scratch']
  #allocation2 [shape = 'bf16[8,128]{1,0:T(8,128)(2,1)}', space=vmem, size = 0x800, scoped, tag = 'scratch operand']
  %s0 = inlined_call_operand.hbm [shape: f32[2,8,32], index: 0, kind: input, shape index: {}]
  %s1 = inlined_call_operand.hbm [shape: bf16[2,8,128], index: 1, kind: input, shape index: {}]
  %s2 = inlined_call_operand.hbm [shape: bf16[2,8,128], index: 2, kind: input, shape index: {}]
  %s3 = inlined_call_operand.hbm [shape: bf16[32,128], index: 3, kind: input, shape index: {}]
  %s4 = inlined_call_operand.vmem [shape: f32[1,128], index: 4, kind: input, shape index: {}]
  %s5 = inlined_call_operand.hbm [shape: bf16[128,128], index: 5, kind: input, shape index: {}]
  %s6 = inlined_call_operand.vmem [shape: f32[1,128], index: 6, kind: input, shape index: {}]
  %s7 = inlined_call_operand.vmem [shape: bf16[32,128], index: 7, kind: input, shape index: {}]
  %s8 = inlined_call_operand.vmem [shape: f32[1,128], index: 8, kind: input, shape index: {}]
  %s9 = inlined_call_operand.vmem [shape: f32[1,128], index: 9, kind: input, shape index: {}]
  %s10 = inlined_call_operand.vmem [shape: f32[1,128], index: 10, kind: input, shape index: {}]
  %s11 = inlined_call_operand.hbm [shape: f32[2,8,128], index: 11, kind: output, shape index: {}]
  %s12 = sld [smem:[#allocation0]]
  $region97: #{tpu_custom_call.1} parent=0
    _
  %s14 = ssub.s32 1, %s12
  %s15 = scalar_select 0, %s14, %s12
  $region1: #{tpu_custom_call.1} parent=0
    #allocation3 [shape = 'u8[8192]{0}', space=vmem, size = 0x2000, scoped, tag = 'input window, operand 0']
    #allocation4 [shape = 's32[2]{0}', space=sflag, size = 0x8, scoped, tag = 'scoped memory for tpu_custom_call.1']
    #allocation5 [shape = 's32[2]{0}', space=sflag, size = 0x8, scoped, tag = 'scoped memory for tpu_custom_call.1']
    #allocation6 [shape = 'u8[4096]{0}', space=vmem, size = 0x1000, scoped, tag = 'input window, operand 1']
    #allocation7 [shape = 's32[2]{0}', space=sflag, size = 0x8, scoped, tag = 'scoped memory for tpu_custom_call.1']
    #allocation8 [shape = 'u8[4096]{0}', space=vmem, size = 0x1000, scoped, tag = 'input window, operand 2']
    #allocation9 [shape = 'u8[8192]{0}', space=vmem, size = 0x2000, scoped, tag = 'input window, operand 3, single buffered']
    #allocation10 [shape = 's32[1]{0}', space=sflag, size = 0x4, scoped, tag = 'scoped memory for tpu_custom_call.1']
    #allocation11 [shape = 'u8[32768]{0}', space=vmem, size = 0x8000, scoped, tag = 'input window, operand 5, single buffered']
    #allocation12 [shape = 'u8[8192]{0}', space=vmem, size = 0x2000, scoped, tag = 'output window, operand 0']
    %16 = vsyncpa [#allocation4], 0
    %s17 = scalar_lea.sflag [#allocation4], 1
    %18 = vsyncpa %s17, 0
    %19 = vsyncpa [#allocation7], 0
    %s20 = scalar_lea.sflag [#allocation7], 1
    %21 = vsyncpa %s20, 0
    %22 = vsyncpa [#allocation10], 0
    %23 = vsyncpa [#allocation5], 0
    %s24 = scalar_lea.sflag [#allocation5], 1
    %25 = vsyncpa %s24, 0
    loop: start=0, step=1, limit=4
    $region2: #{tpu_custom_call.1} parent=1 // loop_pre_header
      _
    $region3: #{tpu_custom_call.1} parent=1 // loop_header
      %s27 = sphi 0, %s31
      %p28 = scmp.ge.s32.totalorder %s27, 4
      %s34 = sphi 0, %s46
      %s35 = sphi 0, %s42
      %s36 = sphi 0, %s34
      %s37 = sphi 0, %s35
      %s38 = sphi 0, %s36
      %s39 = sphi 0, %s37
      %s51 = sphi 0, %s53
      %s54 = sphi 0, %s51
      %s55 = sphi 0, %s54
      %s71 = sphi 0, %s55
      %s77 = sphi 0, %s79
      %s80 = sphi 0, %s77
      %s81 = sphi 0, %s80
      %s97 = sphi 0, %s81
      %s103 = sphi 0, %s105
      %s106 = sphi 0, %s103
      %s107 = sphi 0, %s106
      %s123 = sphi 0, %s107
      %s127 = sphi 0, %s127
      %s129 = sphi 0, %s127
      %s130 = sphi 0, %s129
      %s144 = sphi 0, %s130
      %s148 = sphi 0, %s148
      %s150 = sphi 0, %s148
      %s151 = sphi 0, %s150
      %s165 = sphi 0, %s151
      %s169 = sphi 0, %s169
      %s171 = sphi 0, %s169
      %s172 = sphi 0, %s171
      %s186 = sphi 0, %s172
      %s190 = sphi 0, %s190
      %s192 = sphi 0, %s190
      %s193 = sphi 0, %s192
      %s207 = sphi 0, %s193
      %s211 = sphi 0, %s211
      %s213 = sphi 0, %s211
      %s214 = sphi 0, %s213
      %s228 = sphi 0, %s214
      %s232 = sphi 0, %s232
      %s234 = sphi 0, %s232
      %s235 = sphi 0, %s234
      %s249 = sphi 0, %s235
      %s253 = sphi 0, %s253
      %s255 = sphi 0, %s253
      %s256 = sphi 0, %s255
      %s270 = sphi 0, %s256
      %s274 = sphi 0, %s274
      %s276 = sphi 0, %s274
      %s277 = sphi 0, %s276
      %s291 = sphi 0, %s277
      %s299 = sphi 0, %s301
      %s302 = sphi 0, %s299
      %s303 = sphi 0, %s302
      %s319 = sphi 0, %s303
    $region4: #{tpu_custom_call.1} parent=1 // loop_header_branch
      %30 = sbr.rel (%p28) target = $region8
    $region5: #{tpu_custom_call.1} parent=1 // loop_body
      %s32 = ssub.s32 %s27, 1
      %s33 = ssub.s32 %s27, 2
      %s40 = sadd.s32 1, %s35
      %p41 = scmp.ge.s32.totalorder %s40, 1
      %s42 = scalar_select %p41, 0, %s40
      %s43 = sadd.s32 1, %s34
      %s44 = scalar_select %p41, %s43, %s34
      %p45 = scmp.ge.s32.totalorder %s44, 2
      %s46 = scalar_select %p45, 0, %s44
      %s47 = ssub.s32 %s34, %s46
      %s48 = ssub.s32 %s35, %s42
      %s49 = sor.u32 %s47, %s48
      %p50 = scmp.eq.s32.totalorder %s49, 0
      %s52 = sadd.s32 %s51, 1
      %s53 = scalar_select %p50, %s51, %s52
      %p56 = pneg %p50
      %p57 = scmp.eq.s32.totalorder %s27, 1
      %p58 = por %p56, %p57
      %p59 = scmp.ne.s32.totalorder %s51, %s54
      %p60 = scmp.eq.s32.totalorder %s27, 0
      %p61 = por %p59, %p60
      %p62 = scmp.ne.s32.totalorder %s51, %s54
      %p63 = scmp.eq.s32.totalorder %s32, 1
      %p64 = por %p62, %p63
      %p65 = scmp.ne.s32.totalorder %s54, %s55
      %p66 = scmp.eq.s32.totalorder %s32, 0
      %p67 = por %p65, %p66
      %p68 = scmp.ne.s32.totalorder %s54, %s55
      %p69 = scmp.eq.s32.totalorder %s33, 1
      %p70 = por %p68, %p69
      %p72 = scmp.ne.s32.totalorder %s55, %s71
      %p73 = scmp.eq.s32.totalorder %s33, 0
      %p74 = por %p72, %p73
      %s75 = ssub.s32 %s34, %s46
      %p76 = scmp.eq.s32.totalorder %s75, 0
      %s78 = sadd.s32 %s77, 1
      %s79 = scalar_select %p76, %s77, %s78
      %p82 = pneg %p76
      %p83 = scmp.eq.s32.totalorder %s27, 1
      %p84 = por %p82, %p83
      %p85 = scmp.ne.s32.totalorder %s77, %s80
      %p86 = scmp.eq.s32.totalorder %s27, 0
      %p87 = por %p85, %p86
      %p88 = scmp.ne.s32.totalorder %s77, %s80
      %p89 = scmp.eq.s32.totalorder %s32, 1
      %p90 = por %p88, %p89
      %p91 = scmp.ne.s32.totalorder %s80, %s81
      %p92 = scmp.eq.s32.totalorder %s32, 0
      %p93 = por %p91, %p92
      %p94 = scmp.ne.s32.totalorder %s80, %s81
      %p95 = scmp.eq.s32.totalorder %s33, 1
      %p96 = por %p94, %p95
      %p98 = scmp.ne.s32.totalorder %s81, %s97
      %p99 = scmp.eq.s32.totalorder %s33, 0
      %p100 = por %p98, %p99
      %s101 = ssub.s32 %s34, %s46
      %p102 = scmp.eq.s32.totalorder %s101, 0
      %s104 = sadd.s32 %s103, 1
      %s105 = scalar_select %p102, %s103, %s104
      %p108 = pneg %p102
      %p109 = scmp.eq.s32.totalorder %s27, 1
      %p110 = por %p108, %p109
      %p111 = scmp.ne.s32.totalorder %s103, %s106
      %p112 = scmp.eq.s32.totalorder %s27, 0
      %p113 = por %p111, %p112
      %p114 = scmp.ne.s32.totalorder %s103, %s106
      %p115 = scmp.eq.s32.totalorder %s32, 1
      %p116 = por %p114, %p115
      %p117 = scmp.ne.s32.totalorder %s106, %s107
      %p118 = scmp.eq.s32.totalorder %s32, 0
      %p119 = por %p117, %p118
      %p120 = scmp.ne.s32.totalorder %s106, %s107
      %p121 = scmp.eq.s32.totalorder %s33, 1
      %p122 = por %p120, %p121
      %p124 = scmp.ne.s32.totalorder %s107, %s123
      %p125 = scmp.eq.s32.totalorder %s33, 0
      %p126 = por %p124, %p125
      %s128 = sadd.s32 %s127, 1
      %p131 = scmp.eq.s32.totalorder %s27, 1
      %p132 = scmp.ne.s32.totalorder %s127, %s129
      %p133 = scmp.eq.s32.totalorder %s27, 0
      %p134 = por %p132, %p133
      %p135 = scmp.ne.s32.totalorder %s127, %s129
      %p136 = scmp.eq.s32.totalorder %s32, 1
      %p137 = por %p135, %p136
      %p138 = scmp.ne.s32.totalorder %s129, %s130
      %p139 = scmp.eq.s32.totalorder %s32, 0
      %p140 = por %p138, %p139
      %p141 = scmp.ne.s32.totalorder %s129, %s130
      %p142 = scmp.eq.s32.totalorder %s33, 1
      %p143 = por %p141, %p142
      %p145 = scmp.ne.s32.totalorder %s130, %s144
      %p146 = scmp.eq.s32.totalorder %s33, 0
      %p147 = por %p145, %p146
      %s149 = sadd.s32 %s148, 1
      %p152 = scmp.eq.s32.totalorder %s27, 1
      %p153 = scmp.ne.s32.totalorder %s148, %s150
      %p154 = scmp.eq.s32.totalorder %s27, 0
      %p155 = por %p153, %p154
      %p156 = scmp.ne.s32.totalorder %s148, %s150
      %p157 = scmp.eq.s32.totalorder %s32, 1
      %p158 = por %p156, %p157
      %p159 = scmp.ne.s32.totalorder %s150, %s151
      %p160 = scmp.eq.s32.totalorder %s32, 0
      %p161 = por %p159, %p160
      %p162 = scmp.ne.s32.totalorder %s150, %s151
      %p163 = scmp.eq.s32.totalorder %s33, 1
      %p164 = por %p162, %p163
      %p166 = scmp.ne.s32.totalorder %s151, %s165
      %p167 = scmp.eq.s32.totalorder %s33, 0
      %p168 = por %p166, %p167
      %s170 = sadd.s32 %s169, 1
      %p173 = scmp.eq.s32.totalorder %s27, 1
      %p174 = scmp.ne.s32.totalorder %s169, %s171
      %p175 = scmp.eq.s32.totalorder %s27, 0
      %p176 = por %p174, %p175
      %p177 = scmp.ne.s32.totalorder %s169, %s171
      %p178 = scmp.eq.s32.totalorder %s32, 1
      %p179 = por %p177, %p178
      %p180 = scmp.ne.s32.totalorder %s171, %s172
      %p181 = scmp.eq.s32.totalorder %s32, 0
      %p182 = por %p180, %p181
      %p183 = scmp.ne.s32.totalorder %s171, %s172
      %p184 = scmp.eq.s32.totalorder %s33, 1
      %p185 = por %p183, %p184
      %p187 = scmp.ne.s32.totalorder %s172, %s186
      %p188 = scmp.eq.s32.totalorder %s33, 0
      %p189 = por %p187, %p188
      %s191 = sadd.s32 %s190, 1
      %p194 = scmp.eq.s32.totalorder %s27, 1
      %p195 = scmp.ne.s32.totalorder %s190, %s192
      %p196 = scmp.eq.s32.totalorder %s27, 0
      %p197 = por %p195, %p196
      %p198 = scmp.ne.s32.totalorder %s190, %s192
      %p199 = scmp.eq.s32.totalorder %s32, 1
      %p200 = por %p198, %p199
      %p201 = scmp.ne.s32.totalorder %s192, %s193
      %p202 = scmp.eq.s32.totalorder %s32, 0
      %p203 = por %p201, %p202
      %p204 = scmp.ne.s32.totalorder %s192, %s193
      %p205 = scmp.eq.s32.totalorder %s33, 1
      %p206 = por %p204, %p205
      %p208 = scmp.ne.s32.totalorder %s193, %s207
      %p209 = scmp.eq.s32.totalorder %s33, 0
      %p210 = por %p208, %p209
      %s212 = sadd.s32 %s211, 1
      %p215 = scmp.eq.s32.totalorder %s27, 1
      %p216 = scmp.ne.s32.totalorder %s211, %s213
      %p217 = scmp.eq.s32.totalorder %s27, 0
      %p218 = por %p216, %p217
      %p219 = scmp.ne.s32.totalorder %s211, %s213
      %p220 = scmp.eq.s32.totalorder %s32, 1
      %p221 = por %p219, %p220
      %p222 = scmp.ne.s32.totalorder %s213, %s214
      %p223 = scmp.eq.s32.totalorder %s32, 0
      %p224 = por %p222, %p223
      %p225 = scmp.ne.s32.totalorder %s213, %s214
      %p226 = scmp.eq.s32.totalorder %s33, 1
      %p227 = por %p225, %p226
      %p229 = scmp.ne.s32.totalorder %s214, %s228
      %p230 = scmp.eq.s32.totalorder %s33, 0
      %p231 = por %p229, %p230
      %s233 = sadd.s32 %s232, 1
      %p236 = scmp.eq.s32.totalorder %s27, 1
      %p237 = scmp.ne.s32.totalorder %s232, %s234
      %p238 = scmp.eq.s32.totalorder %s27, 0
      %p239 = por %p237, %p238
      %p240 = scmp.ne.s32.totalorder %s232, %s234
      %p241 = scmp.eq.s32.totalorder %s32, 1
      %p242 = por %p240, %p241
      %p243 = scmp.ne.s32.totalorder %s234, %s235
      %p244 = scmp.eq.s32.totalorder %s32, 0
      %p245 = por %p243, %p244
      %p246 = scmp.ne.s32.totalorder %s234, %s235
      %p247 = scmp.eq.s32.totalorder %s33, 1
      %p248 = por %p246, %p247
      %p250 = scmp.ne.s32.totalorder %s235, %s249
      %p251 = scmp.eq.s32.totalorder %s33, 0
      %p252 = por %p250, %p251
      %s254 = sadd.s32 %s253, 1
      %p257 = scmp.eq.s32.totalorder %s27, 1
      %p258 = scmp.ne.s32.totalorder %s253, %s255
      %p259 = scmp.eq.s32.totalorder %s27, 0
      %p260 = por %p258, %p259
      %p261 = scmp.ne.s32.totalorder %s253, %s255
      %p262 = scmp.eq.s32.totalorder %s32, 1
      %p263 = por %p261, %p262
      %p264 = scmp.ne.s32.totalorder %s255, %s256
      %p265 = scmp.eq.s32.totalorder %s32, 0
      %p266 = por %p264, %p265
      %p267 = scmp.ne.s32.totalorder %s255, %s256
      %p268 = scmp.eq.s32.totalorder %s33, 1
      %p269 = por %p267, %p268
      %p271 = scmp.ne.s32.totalorder %s256, %s270
      %p272 = scmp.eq.s32.totalorder %s33, 0
      %p273 = por %p271, %p272
      %s275 = sadd.s32 %s274, 1
      %p278 = scmp.eq.s32.totalorder %s27, 1
      %p279 = scmp.ne.s32.totalorder %s274, %s276
      %p280 = scmp.eq.s32.totalorder %s27, 0
      %p281 = por %p279, %p280
      %p282 = scmp.ne.s32.totalorder %s274, %s276
      %p283 = scmp.eq.s32.totalorder %s32, 1
      %p284 = por %p282, %p283
      %p285 = scmp.ne.s32.totalorder %s276, %s277
      %p286 = scmp.eq.s32.totalorder %s32, 0
      %p287 = por %p285, %p286
      %p288 = scmp.ne.s32.totalorder %s276, %s277
      %p289 = scmp.eq.s32.totalorder %s33, 1
      %p290 = por %p288, %p289
      %p292 = scmp.ne.s32.totalorder %s277, %s291
      %p293 = scmp.eq.s32.totalorder %s33, 0
      %p294 = por %p292, %p293
      %s295 = ssub.s32 %s34, %s46
      %s296 = ssub.s32 %s35, %s42
      %s297 = sor.u32 %s295, %s296
      %p298 = scmp.eq.s32.totalorder %s297, 0
      %s300 = sadd.s32 %s299, 1
      %s301 = scalar_select %p298, %s299, %s300
      %p304 = pneg %p298
      %p305 = scmp.eq.s32.totalorder %s27, 1
      %p306 = por %p304, %p305
      %p307 = scmp.ne.s32.totalorder %s299, %s302
      %p308 = scmp.eq.s32.totalorder %s27, 0
      %p309 = por %p307, %p308
      %p310 = scmp.ne.s32.totalorder %s299, %s302
      %p311 = scmp.eq.s32.totalorder %s32, 1
      %p312 = por %p310, %p311
      %p313 = scmp.ne.s32.totalorder %s302, %s303
      %p314 = scmp.eq.s32.totalorder %s32, 0
      %p315 = por %p313, %p314
      %p316 = scmp.ne.s32.totalorder %s302, %s303
      %p317 = scmp.eq.s32.totalorder %s33, 1
      %p318 = por %p316, %p317
      %p320 = scmp.ne.s32.totalorder %s303, %s319
      %p321 = scmp.eq.s32.totalorder %s33, 0
      %p322 = por %p320, %p321
      %p323 = scmp.le.s32.totalorder 1, %s27
      %p324 = scmp.lt.s32.totalorder %s27, 3
      %p325 = pnand %p323, %p324
      %p326 = pneg %p325
      // Predicated region
      $region9: #{tpu_custom_call.1} parent=5 // pred_check
        _
      $region10: #{tpu_custom_call.1} parent=5 // pred_check_branch
        %328 = sbr.rel (%p325) target = $region12
      $region11: #{tpu_custom_call.1} parent=5 // pred_region
        %s329 = ssub.s32 %s27, 1
        // Predicated region
        $region13: #{tpu_custom_call.1} parent=11 // pred_check
          %p330 = pneg %p140
        $region14: #{tpu_custom_call.1} parent=11 // pred_check_branch
          %332 = sbr.rel (%p330) target = $region16
        $region15: #{tpu_custom_call.1} parent=11 // pred_region
          %s334 = ssub.s32 256, 256
          %335 = vsyncadd [#allocation10], %s334
          %s336 = sshll.u32 [#allocation9], 4
          %s337 = int_to_ptr.vmem [resolvable:$true] %s336
          %342 = dma.hbm_to_vmem [thread:$0]  %s3, 256, %s337, [#allocation10], 64, 64, 4
        $region16: #{tpu_custom_call.1} parent=11 // pred_fallthru
          _
        // Predicated region
        $region17: #{tpu_custom_call.1} parent=11 // pred_check
          %p343 = pneg %p161
        $region18: #{tpu_custom_call.1} parent=11 // pred_check_branch
          %345 = sbr.rel (%p343) target = $region20
        $region19: #{tpu_custom_call.1} parent=11 // pred_region
          _
        $region20: #{tpu_custom_call.1} parent=11 // pred_fallthru
          _
        // Predicated region
        $region21: #{tpu_custom_call.1} parent=11 // pred_check
          %p346 = pneg %p182
        $region22: #{tpu_custom_call.1} parent=11 // pred_check_branch
          %348 = sbr.rel (%p346) target = $region24
        $region23: #{tpu_custom_call.1} parent=11 // pred_region
          %s350 = ssub.s32 1024, 1024
          %351 = vsyncadd [#allocation10], %s350
          %s352 = sshll.u32 [#allocation11], 4
          %s353 = int_to_ptr.vmem [resolvable:$true] %s352
          %358 = dma.hbm_to_vmem [thread:$0]  %s5, 1024, %s353, [#allocation10], 64, 64, 4
        $region24: #{tpu_custom_call.1} parent=11 // pred_fallthru
          _
        // Predicated region
        $region25: #{tpu_custom_call.1} parent=11 // pred_check
          %p359 = pneg %p203
        $region26: #{tpu_custom_call.1} parent=11 // pred_check_branch
          %361 = sbr.rel (%p359) target = $region28
        $region27: #{tpu_custom_call.1} parent=11 // pred_region
          _
        $region28: #{tpu_custom_call.1} parent=11 // pred_fallthru
          _
        // Predicated region
        $region29: #{tpu_custom_call.1} parent=11 // pred_check
          %p362 = pneg %p224
        $region30: #{tpu_custom_call.1} parent=11 // pred_check_branch
          %364 = sbr.rel (%p362) target = $region32
        $region31: #{tpu_custom_call.1} parent=11 // pred_region
          _
        $region32: #{tpu_custom_call.1} parent=11 // pred_fallthru
          _
        // Predicated region
        $region33: #{tpu_custom_call.1} parent=11 // pred_check
          %p365 = pneg %p245
        $region34: #{tpu_custom_call.1} parent=11 // pred_check_branch
          %367 = sbr.rel (%p365) target = $region36
        $region35: #{tpu_custom_call.1} parent=11 // pred_region
          _
        $region36: #{tpu_custom_call.1} parent=11 // pred_fallthru
          _
        // Predicated region
        $region37: #{tpu_custom_call.1} parent=11 // pred_check
          %p368 = pneg %p266
        $region38: #{tpu_custom_call.1} parent=11 // pred_check_branch
          %370 = sbr.rel (%p368) target = $region40
        $region39: #{tpu_custom_call.1} parent=11 // pred_region
          _
        $region40: #{tpu_custom_call.1} parent=11 // pred_fallthru
          _
        // Predicated region
        $region41: #{tpu_custom_call.1} parent=11 // pred_check
          %p371 = pneg %p287
        $region42: #{tpu_custom_call.1} parent=11 // pred_check_branch
          %373 = sbr.rel (%p371) target = $region44
        $region43: #{tpu_custom_call.1} parent=11 // pred_region
          _
        $region44: #{tpu_custom_call.1} parent=11 // pred_fallthru
          _
      $region12: #{tpu_custom_call.1} parent=5 // pred_fallthru
        _
      %p374 = scmp.lt.s32.totalorder %s27, 2
      // Predicated region
      $region45: #{tpu_custom_call.1} parent=5 // pred_check
        %p375 = pneg %p374
      $region46: #{tpu_custom_call.1} parent=5 // pred_check_branch
        %377 = sbr.rel (%p375) target = $region48
      $region47: #{tpu_custom_call.1} parent=5 // pred_region
        // Predicated region
        $region49: #{tpu_custom_call.1} parent=47 // pred_check
          %p378 = pneg %p61
        $region50: #{tpu_custom_call.1} parent=47 // pred_check_branch
          %380 = sbr.rel (%p378) target = $region52
        $region51: #{tpu_custom_call.1} parent=47 // pred_region
          %s381 = sand.u32 %s51, 1
          %s382 = scalar_lea.sflag [#allocation4], %s381
          %s383 = sand.u32 %s51, 1
          %s384 = smul.addr %s383, 8
          %s385 = scalar_lea.vmem [#allocation3], %s384
          %s387 = ssub.s32 128, 128
          %388 = vsyncadd %s382, %s387
          %s389 = sadd.s32 %s35, %s34
          %s390 = smul.addr %s389, 128
          %s391 = scalar_lea.hbm %s0, %s390
          %s393 = sshll.u32 %s385, 4
          %s394 = int_to_ptr.vmem [resolvable:$true] %s393
          %396 = dma.hbm_to_vmem [thread:$0]  %s391, 128, %s394, %s382
        $region52: #{tpu_custom_call.1} parent=47 // pred_fallthru
          _
        // Predicated region
        $region53: #{tpu_custom_call.1} parent=47 // pred_check
          %p397 = pneg %p87
        $region54: #{tpu_custom_call.1} parent=47 // pred_check_branch
          %399 = sbr.rel (%p397) target = $region56
        $region55: #{tpu_custom_call.1} parent=47 // pred_region
          %s400 = sand.u32 %s27, 1
          %s401 = scalar_lea.sflag [#allocation7], %s400
          %s402 = sand.u32 %s77, 1
          %s403 = smul.addr %s402, 4
          %s404 = scalar_lea.vmem [#allocation6], %s403
          %s406 = ssub.s32 64, 64
          %407 = vsyncadd %s401, %s406
          %s408 = smul.addr %s34, 64
          %s409 = scalar_lea.hbm %s1, %s408
          %s411 = sshll.u32 %s404, 4
          %s412 = int_to_ptr.vmem [resolvable:$true] %s411
          %414 = dma.hbm_to_vmem [thread:$0]  %s409, 64, %s412, %s401
        $region56: #{tpu_custom_call.1} parent=47 // pred_fallthru
          _
        // Predicated region
        $region57: #{tpu_custom_call.1} parent=47 // pred_check
          %p415 = pneg %p113
        $region58: #{tpu_custom_call.1} parent=47 // pred_check_branch
          %417 = sbr.rel (%p415) target = $region60
        $region59: #{tpu_custom_call.1} parent=47 // pred_region
          %s418 = sand.u32 %s27, 1
          %s419 = scalar_lea.sflag [#allocation7], %s418
          %s420 = sand.u32 %s103, 1
          %s421 = smul.addr %s420, 4
          %s422 = scalar_lea.vmem [#allocation8], %s421
          %s424 = ssub.s32 64, 64
          %425 = vsyncadd %s419, %s424
          %s426 = smul.addr %s34, 64
          %s427 = scalar_lea.hbm %s2, %s426
          %s429 = sshll.u32 %s422, 4
          %s430 = int_to_ptr.vmem [resolvable:$true] %s429
          %432 = dma.hbm_to_vmem [thread:$0]  %s427, 64, %s430, %s419
        $region60: #{tpu_custom_call.1} parent=47 // pred_fallthru
          _
      $region48: #{tpu_custom_call.1} parent=5 // pred_fallthru
        _
      %p433 = scmp.le.s32.totalorder 1, %s27
      %p434 = scmp.lt.s32.totalorder %s27, 3
      %p435 = pnand %p433, %p434
      %p436 = pneg %p435
      // Predicated region
      $region61: #{tpu_custom_call.1} parent=5 // pred_check
        _
      $region62: #{tpu_custom_call.1} parent=5 // pred_check_branch
        %438 = sbr.rel (%p435) target = $region64
      $region63: #{tpu_custom_call.1} parent=5 // pred_region
        %s439 = ssub.s32 %s27, 1
        %s440 = sand.u32 %s54, 1
        %s441 = scalar_lea.sflag [#allocation4], %s440
        %s442 = sand.u32 %s54, 1
        %s443 = smul.addr %s442, 8
        %s444 = scalar_lea.vmem [#allocation3], %s443
        // Predicated region
        $region65: #{tpu_custom_call.1} parent=63 // pred_check
          %p445 = pneg %p67
        $region66: #{tpu_custom_call.1} parent=63 // pred_check_branch
          %447 = sbr.rel (%p445) target = $region68
        $region67: #{tpu_custom_call.1} parent=63 // pred_region
          %448 = dma.done %s441, 128
        $region68: #{tpu_custom_call.1} parent=63 // pred_fallthru
          _
        %s449 = sand.u32 %s32, 1
        %s450 = scalar_lea.sflag [#allocation7], %s449
        %s451 = sand.u32 %s80, 1
        %s452 = smul.addr %s451, 4
        %s453 = scalar_lea.vmem [#allocation6], %s452
        // Predicated region
        $region69: #{tpu_custom_call.1} parent=63 // pred_check
          %p454 = pneg %p93
        $region70: #{tpu_custom_call.1} parent=63 // pred_check_branch
          %456 = sbr.rel (%p454) target = $region72
        $region71: #{tpu_custom_call.1} parent=63 // pred_region
          %457 = dma.done %s450, 64
        $region72: #{tpu_custom_call.1} parent=63 // pred_fallthru
          _
        %s458 = sand.u32 %s32, 1
        %s459 = scalar_lea.sflag [#allocation7], %s458
        %s460 = sand.u32 %s106, 1
        %s461 = smul.addr %s460, 4
        %s462 = scalar_lea.vmem [#allocation8], %s461
        // Predicated region
        $region73: #{tpu_custom_call.1} parent=63 // pred_check
          %p463 = pneg %p119
        $region74: #{tpu_custom_call.1} parent=63 // pred_check_branch
          %465 = sbr.rel (%p463) target = $region76
        $region75: #{tpu_custom_call.1} parent=63 // pred_region
          %466 = dma.done %s459, 64
        $region76: #{tpu_custom_call.1} parent=63 // pred_fallthru
          _
        // Predicated region
        $region77: #{tpu_custom_call.1} parent=63 // pred_check
          %p467 = pneg %p140
        $region78: #{tpu_custom_call.1} parent=63 // pred_check_branch
          %469 = sbr.rel (%p467) target = $region80
        $region79: #{tpu_custom_call.1} parent=63 // pred_region
          %470 = dma.done [#allocation10], 256
        $region80: #{tpu_custom_call.1} parent=63 // pred_fallthru
          _
        // Predicated region
        $region81: #{tpu_custom_call.1} parent=63 // pred_check
          %p471 = pneg %p182
        $region82: #{tpu_custom_call.1} parent=63 // pred_check_branch
          %473 = sbr.rel (%p471) target = $region84
        $region83: #{tpu_custom_call.1} parent=63 // pred_region
          %474 = dma.done [#allocation10], 1024
        $region84: #{tpu_custom_call.1} parent=63 // pred_fallthru
          _
        %s475 = sand.u32 %s54, 1
        %s476 = scalar_lea.sflag [#allocation4], %s475
        %s477 = sand.u32 %s54, 1
        %s478 = smul.addr %s477, 8
        %s479 = scalar_lea.vmem [#allocation3], %s478
        %p480 = pneg %p67
        %p481 = pneg %p64
        %s482 = sand.u32 %s32, 1
        %s483 = scalar_lea.sflag [#allocation7], %s482
        %s484 = sand.u32 %s80, 1
        %s485 = smul.addr %s484, 4
        %s486 = scalar_lea.vmem [#allocation6], %s485
        %p487 = pneg %p93
        %p488 = pneg %p90
        %s489 = sand.u32 %s32, 1
        %s490 = scalar_lea.sflag [#allocation7], %s489
        %s491 = sand.u32 %s106, 1
        %s492 = smul.addr %s491, 4
        %s493 = scalar_lea.vmem [#allocation8], %s492
        %p494 = pneg %p119
        %p495 = pneg %p116
        %p496 = pneg %p140
        %p497 = pneg %p137
        %p498 = pneg %p161
        %p499 = pneg %p158
        %p500 = pneg %p182
        %p501 = pneg %p179
        %p502 = pneg %p203
        %p503 = pneg %p200
        %p504 = pneg %p224
        %p505 = pneg %p221
        %p506 = pneg %p245
        %p507 = pneg %p242
        %p508 = pneg %p266
        %p509 = pneg %p263
        %p510 = pneg %p287
        %p511 = pneg %p284
        %p512 = pneg %p315
        %p513 = pneg %p312
        %s514 = sand.u32 %s302, 1
        %s515 = scalar_lea.sflag [#allocation5], %s514
        %s516 = sand.u32 %s302, 1
        %s517 = smul.addr %s516, 8
        %s518 = scalar_lea.vmem [#allocation12], %s517
        %v520 = vld [vmem:[%s444] sm:$0xff]
        %v521 = vpack.c.bf16 %v520, %v520
        %v522 = vld [vmem:[#allocation9] sm:$0xf]
        %v523 = vld [vmem:[#allocation9 + $0x4] sm:$0xf]
        %v524 = vld [vmem:[#allocation9 + $0x8] sm:$0xf]
        %v525 = vld [vmem:[#allocation9 + $0xc] sm:$0xf]
        %v526 = vld [vmem:[%s4] sm:$0x1]
        %v528 = vlaneseq
        %v529 = vshrl.u32 %v528, 7
        %v530 = vsub.s32 0, %v529
        %v531 = vrot.slane %v526, %v530
        %v537 = vunpack.c.l.b16 %v522
        %v538 = vunpack.c.l.b16 %v523
        %v539 = vunpack.c.l.b16 %v524
        %v540 = vunpack.c.l.b16 %v525
        %v541 = vpack.c.b16 %v538, %v537
        %v542 = vpack.c.b16 %v540, %v539
        %vm545 = vcmask 261120
        %v547 = vsel %vm545, %v521, 0
        %549 = vmatprep.subr.bf16.mxu0 0
        %550 = vmatpush1.bf16.msra.mxu0 %v541
        %551 = vmatprep.subr.bf16.mxu0 0
        %552 = vmatpush1.bf16.msra.mxu0 %v542
        %553 = vmatprep.subr.bf16.mxu0 0
        %554 = vmatpush1.bf16.msra.mxu0 0
        %555 = vmatprep.subr.bf16.mxu0 0
        %556 = vmatpush1.bf16.msra.mxu0 0
        %557 = vmatprep.subr.bf16.mxu0 0
        %558 = vmatpush1.bf16.msra.mxu0 0
        %559 = vmatprep.subr.bf16.mxu0 0
        %560 = vmatpush1.bf16.msra.mxu0 0
        %561 = vmatprep.subr.bf16.mxu0 0
        %562 = vmatpush1.bf16.msra.mxu0 0
        %563 = vmatprep.subr.bf16.mxu0 0
        %564 = vmatpush1.bf16.msra.mxu0 0
        %565 = vmatprep.subr.bf16.mxu0 0
        %566 = vmatpush1.bf16.msra.mxu0 0
        %567 = vmatprep.subr.bf16.mxu0 0
        %568 = vmatpush1.bf16.msra.mxu0 0
        %569 = vmatprep.subr.bf16.mxu0 0
        %570 = vmatpush1.bf16.msra.mxu0 0
        %571 = vmatprep.subr.bf16.mxu0 0
        %572 = vmatpush1.bf16.msra.mxu0 0
        %573 = vmatprep.subr.bf16.mxu0 0
        %574 = vmatpush1.bf16.msra.mxu0 0
        %575 = vmatprep.subr.bf16.mxu0 0
        %576 = vmatpush1.bf16.msra.mxu0 0
        %577 = vmatprep.subr.bf16.mxu0 0
        %578 = vmatpush1.bf16.msra.mxu0 0
        %579 = vmatprep.subr.bf16.mxu0 0
        %580 = vmatpush1.bf16.msra.mxu0 0
        %581 = vmatprep.mubr.bf16.mxu0 0
        %582 = vmatmul.mubr.bf16.gmra.mrb[0].mxu0 %v547
        %v583 = vpop.f32.mrb[0].mxu0
        %v584 = vadd.f32 %v531, %v583
        %v585 = vpop.f32.mrb[0].mxu0
        %v586 = vpop.f32.mrb[0].mxu0
        %v587 = vpop.f32.mrb[0].mxu0
        %588 = vdwg.mxu0
        %v589 = vmul.f32 %v584, 0.125
        %v590 = vpack.c.bf16 %v589, %v589
        %v591 = vld [vmem:[%s453] sm:$0xf]
        %v592 = vld [vmem:[%s462] sm:$0xf]
        %vm593 = vcmask 523264
        %v595 = vsel %vm593, %v590, 0
        %v598 = vsel %vm593, %v591, 0
        %600 = vmatprep.subr.bf16.mxu0 0
        %601 = vmatpush1.bf16.xpose.msra.mxu0 %v598
        %602 = vmatprep.subr.bf16.mxu0 0
        %603 = vmatpush1.bf16.xpose.msra.mxu0 0
        %604 = vmatprep.subr.bf16.mxu0 0
        %605 = vmatpush1.bf16.xpose.msra.mxu0 0
        %606 = vmatprep.subr.bf16.mxu0 0
        %607 = vmatpush1.bf16.xpose.msra.mxu0 0
        %608 = vmatprep.subr.bf16.mxu0 0
        %609 = vmatpush1.bf16.xpose.msra.mxu0 0
        %610 = vmatprep.subr.bf16.mxu0 0
        %611 = vmatpush1.bf16.xpose.msra.mxu0 0
        %612 = vmatprep.subr.bf16.mxu0 0
        %613 = vmatpush1.bf16.xpose.msra.mxu0 0
        %614 = vmatprep.subr.bf16.mxu0 0
        %615 = vmatpush1.bf16.xpose.msra.mxu0 0
        %616 = vmatprep.subr.bf16.mxu0 0
        %617 = vmatpush1.bf16.xpose.msra.mxu0 0
        %618 = vmatprep.subr.bf16.mxu0 0
        %619 = vmatpush1.bf16.xpose.msra.mxu0 0
        %620 = vmatprep.subr.bf16.mxu0 0
        %621 = vmatpush1.bf16.xpose.msra.mxu0 0
        %622 = vmatprep.subr.bf16.mxu0 0
        %623 = vmatpush1.bf16.xpose.msra.mxu0 0
        %624 = vmatprep.subr.bf16.mxu0 0
        %625 = vmatpush1.bf16.xpose.msra.mxu0 0
        %626 = vmatprep.subr.bf16.mxu0 0
        %627 = vmatpush1.bf16.xpose.msra.mxu0 0
        %628 = vmatprep.subr.bf16.mxu0 0
        %629 = vmatpush1.bf16.xpose.msra.mxu0 0
        %630 = vmatprep.subr.bf16.mxu0 0
        %631 = vmatpush1.bf16.xpose.msra.mxu0 0
        %632 = vmatprep.mubr.bf16.mxu0 0
        %633 = vmatmul.mubr.bf16.gmra.mrb[0].mxu0 %v595
        %v634 = vpop.f32.mrb[0].mxu0
        %v635 = vadd.f32 0.0, %v634
        %v636 = vpop.f32.mrb[0].mxu0
        %v637 = vpop.f32.mrb[0].mxu0
        %v638 = vpop.f32.mrb[0].mxu0
        %639 = vdwg.mxu0
        %vm640 = vcmask 64512
        %v641 = vsel %vm640, %v635, -inf
        %642 = vmax.xlane.f32.xlu0 %v641
        %v643 = vpop.xlane.xlu0 %642
        %v644 = vsub.f32 %v635, %v643
        %v645 = vmul.f32 %v644, 1.442695
        %v646 = vpow.pop %v645
        %v647 = vsel %vm640, %v646, 0.0
        %648 = vadd.xlane.f32.xlu0 %v647
        %v649 = vpop.xlane.xlu0 %648
        %v650 = vrcp.pop %v649
        %v651 = vmul.f32 %v646, %v650
        %v652 = vpack.c.bf16 %v651, %v651
        %v654 = vsel %vm640, %v652, 0
        %vm656 = vcmask 1043456
        %v658 = vsel %vm656, %v592, 0
        %660 = vmatprep.subr.bf16.mxu0 0
        %661 = vmatpush1.bf16.msra.mxu0 %v658
        %662 = vmatprep.subr.bf16.mxu0 0
        %663 = vmatpush1.bf16.msra.mxu0 0
        %664 = vmatprep.subr.bf16.mxu0 0
        %665 = vmatpush1.bf16.msra.mxu0 0
        %666 = vmatprep.subr.bf16.mxu0 0
        %667 = vmatpush1.bf16.msra.mxu0 0
        %668 = vmatprep.subr.bf16.mxu0 0
        %669 = vmatpush1.bf16.msra.mxu0 0
        %670 = vmatprep.subr.bf16.mxu0 0
        %671 = vmatpush1.bf16.msra.mxu0 0
        %672 = vmatprep.subr.bf16.mxu0 0
        %673 = vmatpush1.bf16.msra.mxu0 0
        %674 = vmatprep.subr.bf16.mxu0 0
        %675 = vmatpush1.bf16.msra.mxu0 0
        %676 = vmatprep.subr.bf16.mxu0 0
        %677 = vmatpush1.bf16.msra.mxu0 0
        %678 = vmatprep.subr.bf16.mxu0 0
        %679 = vmatpush1.bf16.msra.mxu0 0
        %680 = vmatprep.subr.bf16.mxu0 0
        %681 = vmatpush1.bf16.msra.mxu0 0
        %682 = vmatprep.subr.bf16.mxu0 0
        %683 = vmatpush1.bf16.msra.mxu0 0
        %684 = vmatprep.subr.bf16.mxu0 0
        %685 = vmatpush1.bf16.msra.mxu0 0
        %686 = vmatprep.subr.bf16.mxu0 0
        %687 = vmatpush1.bf16.msra.mxu0 0
        %688 = vmatprep.subr.bf16.mxu0 0
        %689 = vmatpush1.bf16.msra.mxu0 0
        %690 = vmatprep.subr.bf16.mxu0 0
        %691 = vmatpush1.bf16.msra.mxu0 0
        %692 = vmatprep.mubr.bf16.mxu0 0
        %693 = vmatmul.mubr.bf16.gmra.mrb[0].mxu0 %v654
        %v694 = vpop.f32.mrb[0].mxu0
        %v695 = vadd.f32 0.0, %v694
        %v696 = vpop.f32.mrb[0].mxu0
        %v697 = vpop.f32.mrb[0].mxu0
        %v698 = vpop.f32.mrb[0].mxu0
        %699 = vdwg.mxu0
        %v700 = vpack.c.bf16 %v695, %v695
        %vm701 = vcmask 519168
        %702 = vst.msk [vmem:[#allocation2] sm:$0xf] %vm701, %v700
        %v703 = vld [vmem:[%s453] sm:$0xf]
        %v704 = vld [vmem:[%s462] sm:$0xf]
        %706 = vrot.lane.b32.xlu0 %v590, 64
        %v707 = vpop.permute.xlu0 %706
        %v709 = vunpack.c.l.b16 %v703
        %v710 = vpack.c.b16 %v709, %v709
        %711 = vrot.lane.b32.xlu0 %v710, 64
        %v712 = vpop.permute.xlu0 %711
        %v714 = vsel %vm593, %v707, 0
        %v717 = vsel %vm593, %v712, 0
        %719 = vmatprep.subr.bf16.mxu0 0
        %720 = vmatpush1.bf16.xpose.msra.mxu0 %v717
        %721 = vmatprep.subr.bf16.mxu0 0
        %722 = vmatpush1.bf16.xpose.msra.mxu0 0
        %723 = vmatprep.subr.bf16.mxu0 0
        %724 = vmatpush1.bf16.xpose.msra.mxu0 0
        %725 = vmatprep.subr.bf16.mxu0 0
        %726 = vmatpush1.bf16.xpose.msra.mxu0 0
        %727 = vmatprep.subr.bf16.mxu0 0
        %728 = vmatpush1.bf16.xpose.msra.mxu0 0
        %729 = vmatprep.subr.bf16.mxu0 0
        %730 = vmatpush1.bf16.xpose.msra.mxu0 0
        %731 = vmatprep.subr.bf16.mxu0 0
        %732 = vmatpush1.bf16.xpose.msra.mxu0 0
        %733 = vmatprep.subr.bf16.mxu0 0
        %734 = vmatpush1.bf16.xpose.msra.mxu0 0
        %735 = vmatprep.subr.bf16.mxu0 0
        %736 = vmatpush1.bf16.xpose.msra.mxu0 0
        %737 = vmatprep.subr.bf16.mxu0 0
        %738 = vmatpush1.bf16.xpose.msra.mxu0 0
        %739 = vmatprep.subr.bf16.mxu0 0
        %740 = vmatpush1.bf16.xpose.msra.mxu0 0
        %741 = vmatprep.subr.bf16.mxu0 0
        %742 = vmatpush1.bf16.xpose.msra.mxu0 0
        %743 = vmatprep.subr.bf16.mxu0 0
        %744 = vmatpush1.bf16.xpose.msra.mxu0 0
        %745 = vmatprep.subr.bf16.mxu0 0
        %746 = vmatpush1.bf16.xpose.msra.mxu0 0
        %747 = vmatprep.subr.bf16.mxu0 0
        %748 = vmatpush1.bf16.xpose.msra.mxu0 0
        %749 = vmatprep.subr.bf16.mxu0 0
        %750 = vmatpush1.bf16.xpose.msra.mxu0 0
        %751 = vmatprep.mubr.bf16.mxu0 0
        %752 = vmatmul.mubr.bf16.gmra.mrb[0].mxu0 %v714
        %v753 = vpop.f32.mrb[0].mxu0
        %v754 = vadd.f32 0.0, %v753
        %v755 = vpop.f32.mrb[0].mxu0
        %v756 = vpop.f32.mrb[0].mxu0
        %v757 = vpop.f32.mrb[0].mxu0
        %758 = vdwg.mxu0
        %v759 = vsel %vm640, %v754, -inf
        %760 = vmax.xlane.f32.xlu0 %v759
        %v761 = vpop.xlane.xlu0 %760
        %v762 = vsub.f32 %v754, %v761
        %v763 = vmul.f32 %v762, 1.442695
        %v764 = vpow.pop %v763
        %v765 = vsel %vm640, %v764, 0.0
        %766 = vadd.xlane.f32.xlu0 %v765
        %v767 = vpop.xlane.xlu0 %766
        %v768 = vrcp.pop %v767
        %v769 = vmul.f32 %v764, %v768
        %v770 = vpack.c.bf16 %v769, %v769
        %v772 = vunpack.c.l.b16 %v704
        %v773 = vpack.c.b16 %v772, %v772
        %774 = vrot.lane.b32.xlu0 %v773, 64
        %v775 = vpop.permute.xlu0 %774
        %v777 = vsel %vm640, %v770, 0
        %v780 = vsel %vm656, %v775, 0
        %782 = vmatprep.subr.bf16.mxu0 0
        %783 = vmatpush1.bf16.msra.mxu0 %v780
        %784 = vmatprep.subr.bf16.mxu0 0
        %785 = vmatpush1.bf16.msra.mxu0 0
        %786 = vmatprep.subr.bf16.mxu0 0
        %787 = vmatpush1.bf16.msra.mxu0 0
        %788 = vmatprep.subr.bf16.mxu0 0
        %789 = vmatpush1.bf16.msra.mxu0 0
        %790 = vmatprep.subr.bf16.mxu0 0
        %791 = vmatpush1.bf16.msra.mxu0 0
        %792 = vmatprep.subr.bf16.mxu0 0
        %793 = vmatpush1.bf16.msra.mxu0 0
        %794 = vmatprep.subr.bf16.mxu0 0
        %795 = vmatpush1.bf16.msra.mxu0 0
        %796 = vmatprep.subr.bf16.mxu0 0
        %797 = vmatpush1.bf16.msra.mxu0 0
        %798 = vmatprep.subr.bf16.mxu0 0
        %799 = vmatpush1.bf16.msra.mxu0 0
        %800 = vmatprep.subr.bf16.mxu0 0
        %801 = vmatpush1.bf16.msra.mxu0 0
        %802 = vmatprep.subr.bf16.mxu0 0
        %803 = vmatpush1.bf16.msra.mxu0 0
        %804 = vmatprep.subr.bf16.mxu0 0
        %805 = vmatpush1.bf16.msra.mxu0 0
        %806 = vmatprep.subr.bf16.mxu0 0
        %807 = vmatpush1.bf16.msra.mxu0 0
        %808 = vmatprep.subr.bf16.mxu0 0
        %809 = vmatpush1.bf16.msra.mxu0 0
        %810 = vmatprep.subr.bf16.mxu0 0
        %811 = vmatpush1.bf16.msra.mxu0 0
        %812 = vmatprep.subr.bf16.mxu0 0
        %813 = vmatpush1.bf16.msra.mxu0 0
        %814 = vmatprep.mubr.bf16.mxu0 0
        %815 = vmatmul.mubr.bf16.gmra.mrb[0].mxu0 %v777
        %v816 = vpop.f32.mrb[0].mxu0
        %v817 = vadd.f32 0.0, %v816
        %v818 = vpop.f32.mrb[0].mxu0
        %v819 = vpop.f32.mrb[0].mxu0
        %v820 = vpop.f32.mrb[0].mxu0
        %821 = vdwg.mxu0
        %v822 = vpack.c.bf16 %v817, %v817
        %v824 = vunpack.c.l.b16 %v822
        %v825 = vpack.c.b16 %v824, %v824
        %826 = vrot.lane.b32.xlu0 %v825, 64
        %v827 = vpop.permute.xlu0 %826
        %vm829 = vcmask 1043968
        %830 = vst.msk [vmem:[#allocation2] sm:$0xf] %vm829, %v827
        %v831 = vld [vmem:[#allocation2] sm:$0xf]
        %v832 = vld [vmem:[#allocation11] sm:$0xf]
        %v833 = vld [vmem:[#allocation11 + $0x4] sm:$0xf]
        %v834 = vld [vmem:[#allocation11 + $0x8] sm:$0xf]
        %v835 = vld [vmem:[#allocation11 + $0xc] sm:$0xf]
        %v836 = vld [vmem:[#allocation11 + $0x10] sm:$0xf]
        %v837 = vld [vmem:[#allocation11 + $0x14] sm:$0xf]
        %v838 = vld [vmem:[#allocation11 + $0x18] sm:$0xf]
        %v839 = vld [vmem:[#allocation11 + $0x1c] sm:$0xf]
        %v840 = vld [vmem:[#allocation11 + $0x20] sm:$0xf]
        %v841 = vld [vmem:[#allocation11 + $0x24] sm:$0xf]
        %v842 = vld [vmem:[#allocation11 + $0x28] sm:$0xf]
        %v843 = vld [vmem:[#allocation11 + $0x2c] sm:$0xf]
        %v844 = vld [vmem:[#allocation11 + $0x30] sm:$0xf]
        %v845 = vld [vmem:[#allocation11 + $0x34] sm:$0xf]
        %v846 = vld [vmem:[#allocation11 + $0x38] sm:$0xf]
        %v847 = vld [vmem:[#allocation11 + $0x3c] sm:$0xf]
        %v848 = vld [vmem:[%s6] sm:$0x1]
        %v850 = vlaneseq
        %v851 = vshrl.u32 %v850, 7
        %v852 = vsub.s32 0, %v851
        %v853 = vrot.slane %v848, %v852
        %v871 = vunpack.c.l.b16 %v832
        %v872 = vunpack.c.l.b16 %v833
        %v873 = vunpack.c.l.b16 %v834
        %v874 = vunpack.c.l.b16 %v835
        %v875 = vunpack.c.l.b16 %v836
        %v876 = vunpack.c.l.b16 %v837
        %v877 = vunpack.c.l.b16 %v838
        %v878 = vunpack.c.l.b16 %v839
        %v879 = vunpack.c.l.b16 %v840
        %v880 = vunpack.c.l.b16 %v841
        %v881 = vunpack.c.l.b16 %v842
        %v882 = vunpack.c.l.b16 %v843
        %v883 = vunpack.c.l.b16 %v844
        %v884 = vunpack.c.l.b16 %v845
        %v885 = vunpack.c.l.b16 %v846
        %v886 = vunpack.c.l.b16 %v847
        %v887 = vpack.c.b16 %v872, %v871
        %v888 = vpack.c.b16 %v874, %v873
        %v889 = vpack.c.b16 %v876, %v875
        %v890 = vpack.c.b16 %v878, %v877
        %v891 = vpack.c.b16 %v880, %v879
        %v892 = vpack.c.b16 %v882, %v881
        %v893 = vpack.c.b16 %v884, %v883
        %v894 = vpack.c.b16 %v886, %v885
        %903 = vmatprep.subr.bf16.mxu0 0
        %904 = vmatpush1.bf16.msra.mxu0 %v887
        %905 = vmatprep.subr.bf16.mxu0 0
        %906 = vmatpush1.bf16.msra.mxu0 %v888
        %907 = vmatprep.subr.bf16.mxu0 0
        %908 = vmatpush1.bf16.msra.mxu0 %v889
        %909 = vmatprep.subr.bf16.mxu0 0
        %910 = vmatpush1.bf16.msra.mxu0 %v890
        %911 = vmatprep.subr.bf16.mxu0 0
        %912 = vmatpush1.bf16.msra.mxu0 %v891
        %913 = vmatprep.subr.bf16.mxu0 0
        %914 = vmatpush1.bf16.msra.mxu0 %v892
        %915 = vmatprep.subr.bf16.mxu0 0
        %916 = vmatpush1.bf16.msra.mxu0 %v893
        %917 = vmatprep.subr.bf16.mxu0 0
        %918 = vmatpush1.bf16.msra.mxu0 %v894
        %919 = vmatprep.subr.bf16.mxu0 0
        %920 = vmatpush1.bf16.msra.mxu0 0
        %921 = vmatprep.subr.bf16.mxu0 0
        %922 = vmatpush1.bf16.msra.mxu0 0
        %923 = vmatprep.subr.bf16.mxu0 0
        %924 = vmatpush1.bf16.msra.mxu0 0
        %925 = vmatprep.subr.bf16.mxu0 0
        %926 = vmatpush1.bf16.msra.mxu0 0
        %927 = vmatprep.subr.bf16.mxu0 0
        %928 = vmatpush1.bf16.msra.mxu0 0
        %929 = vmatprep.subr.bf16.mxu0 0
        %930 = vmatpush1.bf16.msra.mxu0 0
        %931 = vmatprep.subr.bf16.mxu0 0
        %932 = vmatpush1.bf16.msra.mxu0 0
        %933 = vmatprep.subr.bf16.mxu0 0
        %934 = vmatpush1.bf16.msra.mxu0 0
        %935 = vmatprep.mubr.bf16.mxu0 0
        %936 = vmatmul.mubr.bf16.gmra.mrb[0].mxu0 %v831
        %v937 = vpop.f32.mrb[0].mxu0
        %v938 = vadd.f32 %v853, %v937
        %v939 = vpop.f32.mrb[0].mxu0
        %v940 = vpop.f32.mrb[0].mxu0
        %v941 = vpop.f32.mrb[0].mxu0
        %942 = vdwg.mxu0
        %v943 = vld [vmem:[%s7] sm:$0xf]
        %v944 = vld [vmem:[%s7 + $0x4] sm:$0xf]
        %v945 = vld [vmem:[%s7 + $0x8] sm:$0xf]
        %v946 = vld [vmem:[%s7 + $0xc] sm:$0xf]
        %v947 = vld [vmem:[%s8] sm:$0x1]
        %v949 = vlaneseq
        %v950 = vshrl.u32 %v949, 7
        %v951 = vsub.s32 0, %v950
        %v952 = vrot.slane %v947, %v951
        %v958 = vunpack.c.l.b16 %v943
        %v959 = vunpack.c.l.b16 %v944
        %v960 = vunpack.c.l.b16 %v945
        %v961 = vunpack.c.l.b16 %v946
        %v962 = vpack.c.b16 %v959, %v958
        %v963 = vpack.c.b16 %v961, %v960
        %966 = vmatprep.subr.bf16.mxu0 0
        %967 = vmatpush1.bf16.msra.mxu0 %v962
        %968 = vmatprep.subr.bf16.mxu0 0
        %969 = vmatpush1.bf16.msra.mxu0 %v963
        %970 = vmatprep.subr.bf16.mxu0 0
        %971 = vmatpush1.bf16.msra.mxu0 0
        %972 = vmatprep.subr.bf16.mxu0 0
        %973 = vmatpush1.bf16.msra.mxu0 0
        %974 = vmatprep.subr.bf16.mxu0 0
        %975 = vmatpush1.bf16.msra.mxu0 0
        %976 = vmatprep.subr.bf16.mxu0 0
        %977 = vmatpush1.bf16.msra.mxu0 0
        %978 = vmatprep.subr.bf16.mxu0 0
        %979 = vmatpush1.bf16.msra.mxu0 0
        %980 = vmatprep.subr.bf16.mxu0 0
        %981 = vmatpush1.bf16.msra.mxu0 0
        %982 = vmatprep.subr.bf16.mxu0 0
        %983 = vmatpush1.bf16.msra.mxu0 0
        %984 = vmatprep.subr.bf16.mxu0 0
        %985 = vmatpush1.bf16.msra.mxu0 0
        %986 = vmatprep.subr.bf16.mxu0 0
        %987 = vmatpush1.bf16.msra.mxu0 0
        %988 = vmatprep.subr.bf16.mxu0 0
        %989 = vmatpush1.bf16.msra.mxu0 0
        %990 = vmatprep.subr.bf16.mxu0 0
        %991 = vmatpush1.bf16.msra.mxu0 0
        %992 = vmatprep.subr.bf16.mxu0 0
        %993 = vmatpush1.bf16.msra.mxu0 0
        %994 = vmatprep.subr.bf16.mxu0 0
        %995 = vmatpush1.bf16.msra.mxu0 0
        %996 = vmatprep.subr.bf16.mxu0 0
        %997 = vmatpush1.bf16.msra.mxu0 0
        %998 = vmatprep.mubr.bf16.mxu0 0
        %999 = vmatmul.mubr.bf16.gmra.mrb[0].mxu0 %v547
        %v1000 = vpop.f32.mrb[0].mxu0
        %v1001 = vadd.f32 %v952, %v1000
        %v1002 = vpop.f32.mrb[0].mxu0
        %v1003 = vpop.f32.mrb[0].mxu0
        %v1004 = vpop.f32.mrb[0].mxu0
        %1005 = vdwg.mxu0
        %v1006 = vadd.f32 %v938, %v1001
        %1007 = vadd.xlane.f32.xlu0 %v1006
        %v1008 = vpop.xlane.xlu0 %1007
        %v1009 = vrcp.pop 128.0
        %v1010 = vmul.f32 %v1008, %v1009
        %v1011 = vsub.f32 %v1006, %v1010
        %v1012 = vmul.f32 %v1011, %v1011
        %1013 = vadd.xlane.f32.xlu0 %v1012
        %v1014 = vpop.xlane.xlu0 %1013
        %v1015 = vmul.f32 %v1014, %v1009
        %v1016 = vadd.f32 %v1015, 1e-12
        %v1017 = vrsqrt.pop %v1016
        %v1018 = vmul.f32 %v1011, %v1017
        %v1019 = vld [vmem:[%s9] sm:$0x1]
        %v1021 = vlaneseq
        %v1022 = vshrl.u32 %v1021, 7
        %v1023 = vsub.s32 0, %v1022
        %v1024 = vrot.slane %v1019, %v1023
        %v1026 = vmul.f32 %v1018, %v1024
        %v1027 = vld [vmem:[%s10] sm:$0x1]
        %v1029 = vlaneseq
        %v1030 = vshrl.u32 %v1029, 7
        %v1031 = vsub.s32 0, %v1030
        %v1032 = vrot.slane %v1027, %v1031
        %v1034 = vadd.f32 %v1026, %v1032
        %1035 = vst [vmem:[%s518] sm:$0xff] %v1034
        %s1036 = sand.u32 %s302, 1
        %s1037 = scalar_lea.sflag [#allocation5], %s1036
        %s1038 = sand.u32 %s302, 1
        %s1039 = smul.addr %s1038, 8
        %s1040 = scalar_lea.vmem [#allocation12], %s1039
        // Predicated region
        $region85: #{tpu_custom_call.1} parent=63 // pred_check
          %p1041 = pneg %p312
        $region86: #{tpu_custom_call.1} parent=63 // pred_check_branch
          %1043 = sbr.rel (%p1041) target = $region88
        $region87: #{tpu_custom_call.1} parent=63 // pred_region
          %s1045 = ssub.s32 128, 128
          %1046 = vsyncadd %s1037, %s1045
          %s1047 = sadd.s32 %s37, %s36
          %s1048 = smul.addr %s1047, 128
          %s1049 = scalar_lea.hbm %s11, %s1048
          %s1051 = sshll.u32 %s1040, 4
          %s1052 = int_to_ptr.vmem [resolvable:$true] %s1051
          %1054 = dma.vmem_to_hbm [thread:$0]  %s1052, 128, %s1049, %s1037
        $region88: #{tpu_custom_call.1} parent=63 // pred_fallthru
          _
      $region64: #{tpu_custom_call.1} parent=5 // pred_fallthru
        _
      %p1055 = scmp.le.s32.totalorder 2, %s27
      // Predicated region
      $region89: #{tpu_custom_call.1} parent=5 // pred_check
        %p1056 = pneg %p1055
      $region90: #{tpu_custom_call.1} parent=5 // pred_check_branch
        %1058 = sbr.rel (%p1056) target = $region92
      $region91: #{tpu_custom_call.1} parent=5 // pred_region
        %s1059 = ssub.s32 %s27, 2
        // Predicated region
        $region93: #{tpu_custom_call.1} parent=91 // pred_check
          %p1060 = pneg %p318
        $region94: #{tpu_custom_call.1} parent=91 // pred_check_branch
          %1062 = sbr.rel (%p1060) target = $region96
        $region95: #{tpu_custom_call.1} parent=91 // pred_region
          %s1063 = sand.u32 %s303, 1
          %s1064 = scalar_lea.sflag [#allocation5], %s1063
          %s1065 = sand.u32 %s303, 1
          %s1066 = smul.addr %s1065, 8
          %s1067 = scalar_lea.vmem [#allocation12], %s1066
          %1068 = dma.done %s1064, 128
        $region96: #{tpu_custom_call.1} parent=91 // pred_fallthru
          _
      $region92: #{tpu_custom_call.1} parent=5 // pred_fallthru
        _
    $region6: #{tpu_custom_call.1} parent=1 // loop_footer
      %s31 = sadd.s32 1, %s27
    $region7: #{tpu_custom_call.1} parent=1 // loop_footer_branch
      %26 = sbr.rel target = $region3
    $region8: #{tpu_custom_call.1} parent=1 // loop_exit
      _
    %1069 = vsyncpa [#allocation4], 1
    %s1070 = scalar_lea.sflag [#allocation4], 1
    %1071 = vsyncpa %s1070, 1
    %1072 = vsyncpa [#allocation7], 1
    %s1073 = scalar_lea.sflag [#allocation7], 1
    %1074 = vsyncpa %s1073, 1
    %1075 = vsyncpa [#allocation10], 1
    %1076 = vsyncpa [#allocation5], 1
    %s1077 = scalar_lea.sflag [#allocation5], 1
    %1078 = vsyncpa %s1077, 1

</llo_original>
